<compile_context>
chip_gen: v7x
topology: tpu7x:2x2x1
jax: 0.10.0
libtpu: 0.0.40
codegen_flags: <defaults>
</compile_context>

<pallas_src>
import jax
import jax.numpy as jnp
from jax.experimental import pallas as pl
from jax.experimental.pallas import tpu as pltpu

NEG_SLOPE = 0.01   # nn.LeakyReLU() default negative_slope
N_CLASSES = 65
OUT_LANES = 128    # lane-dense (zero/-inf padded) logit width


def _round_up(n, m):
    return ((n + m - 1) // m) * m


# ----------------------------------------------------------------------------- params

def _init_linear(key, fan_in, fan_out):
    """PyTorch-style uniform(-1/sqrt(fan_in), 1/sqrt(fan_in)) init (f32)."""
    kw, kb = jax.random.split(key)
    bound = 1.0 / jnp.sqrt(jnp.float32(fan_in))
    w = jax.random.uniform(kw, (fan_in, fan_out), jnp.float32, -bound, bound)
    b = jax.random.uniform(kb, (fan_out,), jnp.float32, -bound, bound)
    return w, b


def make_params(key, hidden_size, v_hidden_size):
    dims_vis = [(v_hidden_size, v_hidden_size), (v_hidden_size, 512), (512, 256), (256, 256)]
    dims_txt = [(hidden_size, hidden_size), (hidden_size, 512), (512, 256), (256, 256)]
    dims_fus = [(512, 512), (512, 256), (256, 256), (256, N_CLASSES)]
    keys = jax.random.split(key, 12)
    vis = [_init_linear(keys[i], fi, fo) for i, (fi, fo) in enumerate(dims_vis)]
    txt = [_init_linear(keys[4 + i], fi, fo) for i, (fi, fo) in enumerate(dims_txt)]
    fus = [_init_linear(keys[8 + i], fi, fo) for i, (fi, fo) in enumerate(dims_fus)]
    return vis, txt, fus


def pack_params(vis, txt, fus, hidden_size, v_hidden_size):
    """Pack 12 (w, b) pairs into 3 bf16 weight slabs + 1 f32 bias slab."""
    V, H = v_hidden_size, hidden_size
    bf16 = jnp.bfloat16

    (vw0, vb0), (vw1, vb1), (vw2, vb2), (vw3, vb3) = vis
    (tw0, tb0), (tw1, tb1), (tw2, tb2), (tw3, tb3) = txt
    (fw0, fb0), (fw1, fb1), (fw2, fb2), (fw3, fb3) = fus

    # out=512 slab: [vis_w1 (V); txt_w1 (H); fus_w0[:256]; fus_w0[256:]] -> (V+H+512, 512)
    w512 = jnp.concatenate([vw1, tw1, fw0[:256, :], fw0[256:, :]], axis=0).astype(bf16)

    # out=256 slab: [vis_w2; vis_w3; txt_w2; txt_w3; fus_w1; fus_w2] -> (2304, 256)
    w256 = jnp.concatenate([vw2, vw3, tw2, tw3, fw1, fw2], axis=0).astype(bf16)

    # misc slab (column-padded to 128 lanes): [vis_w0 (V,V); txt_w0 (H,H); fus_w3 (256,65)]
    def pad128(w):
        return jnp.pad(w, ((0, 0), (0, OUT_LANES - w.shape[1])))
    wmisc = jnp.concatenate([pad128(vw0), pad128(tw0), pad128(fw3)], axis=0).astype(bf16)

    # all 12 biases in one f32 slab, each row zero-padded to 512 lanes.
    def padb(b):
        return jnp.pad(b, (0, 512 - b.shape[0]))[None, :]
    b_slab = jnp.concatenate(
        [padb(vb0), padb(vb1), padb(vb2), padb(vb3),
         padb(tb0), padb(tb1), padb(tb2), padb(tb3),
         padb(fb0), padb(fb1), padb(fb2), padb(fb3)], axis=0)

    return w512, w256, wmisc, b_slab


# ----------------------------------------------------------------------------- kernel

def _make_kernel(V, H, overlap_w256):
    def kernel(x_ref, w512_ref, w256_in, wmisc_ref, b_ref, out_ref, *scratch):
        if overlap_w256:
            # w256_in is the raw HBM ref (memory_space=pl.ANY); start the 1.18 MB fetch now
            # and hide it behind the first two layers of both pipes.
            w256_ref, dma_sem = scratch
            w256_copy = pltpu.make_async_copy(w256_in, w256_ref, dma_sem)
            w256_copy.start()
        else:
            w256_ref = w256_in  # VMEM-resident (constant index_map)

        def bias(i, n):
            return b_ref[i:i + 1, 0:n]                      # (1, n) f32, broadcasts over batch

        def leaky(v):                                       # f32 elementwise
            return jnp.where(v > 0, v, NEG_SLOPE * v)

        def dot(a, w):                                      # bf16 MXU, f32 accumulate
            return jnp.dot(a.astype(jnp.bfloat16), w, preferred_element_type=jnp.float32)

        x = x_ref[...]                                      # (TB, V+H) bf16, already cast
        hv = x[:, 0:V]
        hw = x[:, V:V + H]

        # --- layers 1-2 of both pipes: only wmisc / w512 needed (w256 DMA in flight) ---
        hv = leaky(dot(hv, wmisc_ref[0:V, 0:V]) + bias(0, V))
        hw = leaky(dot(hw, wmisc_ref[V:V + H, 0:H]) + bias(4, H))
        hv = leaky(dot(hv, w512_ref[0:V, :]) + bias(1, 512))
        hw = leaky(dot(hw, w512_ref[V:V + H, :]) + bias(5, 512))

        if overlap_w256:
            w256_copy.wait()

        # --- layers 3-4 of both pipes ---
        hv = leaky(dot(hv, w256_ref[0:512, :]) + bias(2, 256))
        hv = dot(hv, w256_ref[512:768, :]) + bias(3, 256)
        hw = leaky(dot(hw, w256_ref[768:1280, :]) + bias(6, 256))
        hw = dot(hw, w256_ref[1280:1536, :]) + bias(7, 256)

        # --- ce_fusion; concat eliminated: cat(hv,hw) @ fw0 == hv @ fw0[:256] + hw @ fw0[256:]
        f = leaky(dot(hv, w512_ref[V + H:V + H + 256, :])
                  + dot(hw, w512_ref[V + H + 256:V + H + 512, :])
                  + bias(8, 512))
        f = leaky(dot(f, w256_ref[1536:2048, :]) + bias(9, 256))
        f = leaky(dot(f, w256_ref[2048:2304, :]) + bias(10, 256))

        # --- lane-dense logits (TB, 128): fw3 cols >= 65 and bias lanes >= 65 are zero ---
        logits = dot(f, wmisc_ref[V + H:V + H + 256, :]) + bias(11, OUT_LANES)
        lane = jax.lax.broadcasted_iota(jnp.int32, logits.shape, 1)
        logits = jnp.where(lane < N_CLASSES, logits, -jnp.inf)

        # softmax over last dim (PyTorch implicit dim=1 for 2-D); squeeze(-1) is a no-op.
        m = jnp.max(logits, axis=-1, keepdims=True)
        e = jnp.exp(logits - m)
        s = jnp.sum(e, axis=-1, keepdims=True)
        out_ref[...] = (e / s).astype(out_ref.dtype)        # exact normalization (cheap here)

    return kernel


def dvqa_regressor_v20_ce(hv_0, hw_0, packed, hidden_size, v_hidden_size, block_batch=128):
    w512, w256, wmisc, b_slab = packed
    V, H = v_hidden_size, hidden_size
    batch = hv_0.shape[0]

    # One lane-concatenated bf16 activation input: one DMA, no first-layer cast.
    x0 = jnp.concatenate([hv_0, hw_0], axis=-1).astype(jnp.bfloat16)   # (B, V+H)

    tb = block_batch if batch > block_batch else _round_up(batch, 8)
    padded_batch = _round_up(batch, tb)
    if padded_batch != batch:
        x0 = jnp.pad(x0, ((0, padded_batch - batch), (0, 0)))
    num_steps = padded_batch // tb

    # Single batch tile -> hide the w256 slab DMA behind the first two layers (manual copy).
    # Multiple tiles  -> keep w256 VMEM-resident via a constant index_map (DMA'd once) and
    # shard batch tiles across TensorCores with "parallel" semantics.
    overlap_w256 = (num_steps == 1)

    kernel = _make_kernel(V, H, overlap_w256)

    const2 = lambda i: (0, 0)
    in_specs = [
        pl.BlockSpec((tb, V + H), lambda i: (i, 0)),                       # activations
        pl.BlockSpec(w512.shape, const2),                                  # weight slab, resident
        (pl.BlockSpec(memory_space=pl.ANY) if overlap_w256
         else pl.BlockSpec(w256.shape, const2)),                           # big weight slab
        pl.BlockSpec(wmisc.shape, const2),                                 # misc slab, resident
        pl.BlockSpec(b_slab.shape, const2),                                # bias slab, resident
    ]
    out_specs = pl.BlockSpec((tb, OUT_LANES), lambda i: (i, 0))
    scratch_shapes = ([pltpu.VMEM(w256.shape, jnp.bfloat16), pltpu.SemaphoreType.DMA(())]
                      if overlap_w256 else [])

    # Advisory cost estimate so XLA can overlap surrounding HLO with this tiny call.
    macs_per_row = (V * V + V * 512 + H * H + H * 512 + 512 * 512
                    + 3 * 512 * 256 + 3 * 256 * 256 + 256 * OUT_LANES)
    bytes_accessed = int(
        x0.size * x0.dtype.itemsize
        + w512.size * w512.dtype.itemsize
        + w256.size * w256.dtype.itemsize
        + wmisc.size * wmisc.dtype.itemsize
        + b_slab.size * b_slab.dtype.itemsize
        + padded_batch * OUT_LANES * 4)
    cost = pl.CostEstimate(flops=2 * padded_batch * macs_per_row,
                           transcendentals=padded_batch * OUT_LANES,
                           bytes_accessed=bytes_accessed)

    out = pl.pallas_call(
        kernel,
        out_shape=jax.ShapeDtypeStruct((padded_batch, OUT_LANES), jnp.float32),
        grid_spec=pltpu.PrefetchScalarGridSpec(
            num_scalar_prefetch=0,
            grid=(num_steps,),
            in_specs=in_specs,
            out_specs=out_specs,
            scratch_shapes=scratch_shapes,
        ),
        compiler_params=pltpu.CompilerParams(
            dimension_semantics=(("parallel",) if num_steps > 1 else ("arbitrary",))),
        cost_estimate=cost,
    )(x0, w512, w256, wmisc, b_slab)

    return out[:batch, :N_CLASSES]


# ----------------------------------------------------------------------------- reference

def _reference(hv_0, hw_0, vis, txt, fus):
    """Pure-JAX reference with matching bf16-weight / f32-accumulate numerics."""
    bf16 = jnp.bfloat16

    def lin(x, w, b):
        return jnp.dot(x.astype(bf16), w.astype(bf16),
                       preferred_element_type=jnp.float32) + b

    def leaky(x):
        return jnp.where(x > 0, x, NEG_SLOPE * x)

    def pipe(x, layers):
        for i, (w, b) in enumerate(layers):
            x = lin(x, w, b)
            if i < 3:
                x = leaky(x)
        return x

    hw = pipe(hw_0, txt)
    hv = pipe(hv_0, vis)
    x = jnp.concatenate([hv, hw], axis=-1)
    for i in range(3):
        x = leaky(lin(x, fus[i][0], fus[i][1]))
    logits = lin(x, fus[3][0], fus[3][1])
    return jax.nn.softmax(logits, axis=-1)


# ----------------------------------------------------------------------------- main

if __name__ == "__main__":
    batch = 8
    hidden_size = 32     # config.hidden_size   (multiple of 16 -> tile-aligned slab slices)
    v_hidden_size = 48   # config.v_hidden_size (multiple of 16)

    key = jax.random.PRNGKey(0)
    k_hv, k_hw, k_params = jax.random.split(key, 3)
    hv_0 = jax.random.normal(k_hv, (batch, v_hidden_size), jnp.float32)
    hw_0 = jax.random.normal(k_hw, (batch, hidden_size), jnp.float32)

    vis, txt, fus = make_params(k_params, hidden_size, v_hidden_size)
    packed = pack_params(vis, txt, fus, hidden_size, v_hidden_size)

    out = dvqa_regressor_v20_ce(hv_0, hw_0, packed, hidden_size, v_hidden_size)
    out = jax.block_until_ready(out)

    ref = _reference(hv_0, hw_0, vis, txt, fus)
    assert out.shape == (batch, N_CLASSES), out.shape
    max_err = float(jnp.max(jnp.abs(out - ref)))
    # bf16 weights => compare against matching low-precision reference at a loosened
    # (but still meaningful for probabilities <= 1) tolerance.
    assert jnp.allclose(out, ref, atol=5e-3, rtol=0.0), f"mismatch vs reference, max|err|={max_err}"

    print("KERNEL_OK")
</pallas_src>

<mosaic_0001>
module attributes {stable_mosaic.version = 11 : i64} {
  func.func @kernel(%arg0: i32, %arg1: memref<8x80xbf16, #tpu.memory_space<vmem>>, %arg2: memref<592x512xbf16, #tpu.memory_space<vmem>>, %arg3: memref<2304x256xbf16, #tpu.memory_space<any>>, %arg4: memref<336x128xbf16, #tpu.memory_space<vmem>>, %arg5: memref<12x512xf32, #tpu.memory_space<vmem>>, %arg6: memref<8x128xf32, #tpu.memory_space<vmem>>, %arg7: memref<2304x256xbf16, #tpu.memory_space<vmem>>, %arg8: memref<!tpu.dma_semaphore, #tpu.memory_space<semaphore_mem>>) attributes {dimension_semantics = [#tpu.dimension_semantics<arbitrary>], iteration_bounds = array<i64: 1>, scalar_prefetch = 0 : i64, scratch_operands = 2 : i64, tpu.core_type = #tpu.core_type<tc>, window_params = [{transform_indices = @transform_0, window_bounds = array<i64: 8, 80>}, {pipeline_mode = #tpu.pipeline_mode<synchronous>, transform_indices = @transform_1, window_bounds = array<i64: 592, 512>}, {}, {pipeline_mode = #tpu.pipeline_mode<synchronous>, transform_indices = @transform_3, window_bounds = array<i64: 336, 128>}, {pipeline_mode = #tpu.pipeline_mode<synchronous>, transform_indices = @transform_4, window_bounds = array<i64: 12, 512>}, {transform_indices = @transform_5, window_bounds = array<i64: 8, 128>}]} {
    tpu.enqueue_dma source(%arg3 : memref<2304x256xbf16, #tpu.memory_space<any>>) target(%arg7 : memref<2304x256xbf16, #tpu.memory_space<vmem>>) target_semaphore(%arg8 : memref<!tpu.dma_semaphore, #tpu.memory_space<semaphore_mem>>)
    %c0 = arith.constant 0 : index
    %c0_0 = arith.constant 0 : index
    %0 = vector.load %arg1[%c0, %c0_0] : memref<8x80xbf16, #tpu.memory_space<vmem>>, vector<8x80xbf16>
    %1 = vector.extract_strided_slice %0 {offsets = [0, 0], sizes = [8, 48], strides = [1, 1]} : vector<8x80xbf16> to vector<8x48xbf16>
    %2 = vector.extract_strided_slice %0 {offsets = [0, 48], sizes = [8, 32], strides = [1, 1]} : vector<8x80xbf16> to vector<8x32xbf16>
    %c0_1 = arith.constant 0 : index
    %c0_2 = arith.constant 0 : index
    %3 = vector.load %arg4[%c0_1, %c0_2] : memref<336x128xbf16, #tpu.memory_space<vmem>>, vector<48x48xbf16>
    %cst = arith.constant dense<0.000000e+00> : vector<8x48xf32>
    %4 = tpu.matmul %1, %3, %cst {dimension_numbers = #tpu.dot_dimension_numbers<[1], [0], [0], [1], [0, 0, 1, 1], [], []>} : vector<8x48xbf16>, vector<48x48xbf16>, vector<8x48xf32> -> vector<8x48xf32>
    %c0_3 = arith.constant 0 : index
    %c0_4 = arith.constant 0 : index
    %5 = vector.load %arg5[%c0_3, %c0_4] : memref<12x512xf32, #tpu.memory_space<vmem>>, vector<1x48xf32>
    %6 = vector.broadcast %5 : vector<1x48xf32> to vector<8x48xf32>
    %7 = arith.addf %4, %6 : vector<8x48xf32>
    %cst_5 = arith.constant 0.000000e+00 : f32
    %8 = vector.broadcast %cst_5 : f32 to vector<8x48xf32>
    %9 = arith.cmpf ogt, %7, %8 : vector<8x48xf32>
    %cst_6 = arith.constant 0.00999999977 : f32
    %10 = vector.broadcast %cst_6 : f32 to vector<8x48xf32>
    %11 = arith.mulf %10, %7 : vector<8x48xf32>
    %12 = arith.select %9, %7, %11 : vector<8x48xi1>, vector<8x48xf32>
    %c48 = arith.constant 48 : index
    %c0_7 = arith.constant 0 : index
    %13 = vector.load %arg4[%c48, %c0_7] : memref<336x128xbf16, #tpu.memory_space<vmem>>, vector<32x32xbf16>
    %cst_8 = arith.constant dense<0.000000e+00> : vector<8x32xf32>
    %14 = tpu.matmul %2, %13, %cst_8 {dimension_numbers = #tpu.dot_dimension_numbers<[1], [0], [0], [1], [0, 0, 1, 1], [], []>} : vector<8x32xbf16>, vector<32x32xbf16>, vector<8x32xf32> -> vector<8x32xf32>
    %c4 = arith.constant 4 : index
    %c0_9 = arith.constant 0 : index
    %15 = vector.load %arg5[%c4, %c0_9] : memref<12x512xf32, #tpu.memory_space<vmem>>, vector<1x32xf32>
    %16 = vector.broadcast %15 : vector<1x32xf32> to vector<8x32xf32>
    %17 = arith.addf %14, %16 : vector<8x32xf32>
    %cst_10 = arith.constant 0.000000e+00 : f32
    %18 = vector.broadcast %cst_10 : f32 to vector<8x32xf32>
    %19 = arith.cmpf ogt, %17, %18 : vector<8x32xf32>
    %cst_11 = arith.constant 0.00999999977 : f32
    %20 = vector.broadcast %cst_11 : f32 to vector<8x32xf32>
    %21 = arith.mulf %20, %17 : vector<8x32xf32>
    %22 = arith.select %19, %17, %21 : vector<8x32xi1>, vector<8x32xf32>
    %c0_12 = arith.constant 0 : index
    %c0_13 = arith.constant 0 : index
    %23 = vector.load %arg2[%c0_12, %c0_13] : memref<592x512xbf16, #tpu.memory_space<vmem>>, vector<48x512xbf16>
    %24 = arith.truncf %12 : vector<8x48xf32> to vector<8x48xbf16>
    %cst_14 = arith.constant dense<0.000000e+00> : vector<8x512xf32>
    %25 = tpu.matmul %24, %23, %cst_14 {dimension_numbers = #tpu.dot_dimension_numbers<[1], [0], [0], [1], [0, 0, 1, 1], [], []>} : vector<8x48xbf16>, vector<48x512xbf16>, vector<8x512xf32> -> vector<8x512xf32>
    %c1 = arith.constant 1 : index
    %c0_15 = arith.constant 0 : index
    %26 = vector.load %arg5[%c1, %c0_15] : memref<12x512xf32, #tpu.memory_space<vmem>>, vector<1x512xf32>
    %27 = vector.broadcast %26 : vector<1x512xf32> to vector<8x512xf32>
    %28 = arith.addf %25, %27 : vector<8x512xf32>
    %cst_16 = arith.constant 0.000000e+00 : f32
    %29 = vector.broadcast %cst_16 : f32 to vector<8x512xf32>
    %30 = arith.cmpf ogt, %28, %29 : vector<8x512xf32>
    %cst_17 = arith.constant 0.00999999977 : f32
    %31 = vector.broadcast %cst_17 : f32 to vector<8x512xf32>
    %32 = arith.mulf %31, %28 : vector<8x512xf32>
    %33 = arith.select %30, %28, %32 : vector<8x512xi1>, vector<8x512xf32>
    %c48_18 = arith.constant 48 : index
    %c0_19 = arith.constant 0 : index
    %34 = vector.load %arg2[%c48_18, %c0_19] : memref<592x512xbf16, #tpu.memory_space<vmem>>, vector<32x512xbf16>
    %35 = arith.truncf %22 : vector<8x32xf32> to vector<8x32xbf16>
    %cst_20 = arith.constant dense<0.000000e+00> : vector<8x512xf32>
    %36 = tpu.matmul %35, %34, %cst_20 {dimension_numbers = #tpu.dot_dimension_numbers<[1], [0], [0], [1], [0, 0, 1, 1], [], []>} : vector<8x32xbf16>, vector<32x512xbf16>, vector<8x512xf32> -> vector<8x512xf32>
    %c5 = arith.constant 5 : index
    %c0_21 = arith.constant 0 : index
    %37 = vector.load %arg5[%c5, %c0_21] : memref<12x512xf32, #tpu.memory_space<vmem>>, vector<1x512xf32>
    %38 = vector.broadcast %37 : vector<1x512xf32> to vector<8x512xf32>
    %39 = arith.addf %36, %38 : vector<8x512xf32>
    %cst_22 = arith.constant 0.000000e+00 : f32
    %40 = vector.broadcast %cst_22 : f32 to vector<8x512xf32>
    %41 = arith.cmpf ogt, %39, %40 : vector<8x512xf32>
    %cst_23 = arith.constant 0.00999999977 : f32
    %42 = vector.broadcast %cst_23 : f32 to vector<8x512xf32>
    %43 = arith.mulf %42, %39 : vector<8x512xf32>
    %44 = arith.select %41, %39, %43 : vector<8x512xi1>, vector<8x512xf32>
    tpu.wait_dma2 semaphore(%arg8 : memref<!tpu.dma_semaphore, #tpu.memory_space<semaphore_mem>>) src(%arg3 : memref<2304x256xbf16, #tpu.memory_space<any>>) dst(%arg7 : memref<2304x256xbf16, #tpu.memory_space<vmem>>)
    %c0_24 = arith.constant 0 : index
    %c0_25 = arith.constant 0 : index
    %45 = vector.load %arg7[%c0_24, %c0_25] : memref<2304x256xbf16, #tpu.memory_space<vmem>>, vector<512x256xbf16>
    %46 = arith.truncf %33 : vector<8x512xf32> to vector<8x512xbf16>
    %cst_26 = arith.constant dense<0.000000e+00> : vector<8x256xf32>
    %47 = tpu.matmul %46, %45, %cst_26 {dimension_numbers = #tpu.dot_dimension_numbers<[1], [0], [0], [1], [0, 0, 1, 1], [], []>} : vector<8x512xbf16>, vector<512x256xbf16>, vector<8x256xf32> -> vector<8x256xf32>
    %c2 = arith.constant 2 : index
    %c0_27 = arith.constant 0 : index
    %48 = vector.load %arg5[%c2, %c0_27] : memref<12x512xf32, #tpu.memory_space<vmem>>, vector<1x256xf32>
    %49 = vector.broadcast %48 : vector<1x256xf32> to vector<8x256xf32>
    %50 = arith.addf %47, %49 : vector<8x256xf32>
    %cst_28 = arith.constant 0.000000e+00 : f32
    %51 = vector.broadcast %cst_28 : f32 to vector<8x256xf32>
    %52 = arith.cmpf ogt, %50, %51 : vector<8x256xf32>
    %cst_29 = arith.constant 0.00999999977 : f32
    %53 = vector.broadcast %cst_29 : f32 to vector<8x256xf32>
    %54 = arith.mulf %53, %50 : vector<8x256xf32>
    %55 = arith.select %52, %50, %54 : vector<8x256xi1>, vector<8x256xf32>
    %c512 = arith.constant 512 : index
    %c0_30 = arith.constant 0 : index
    %56 = vector.load %arg7[%c512, %c0_30] : memref<2304x256xbf16, #tpu.memory_space<vmem>>, vector<256x256xbf16>
    %57 = arith.truncf %55 : vector<8x256xf32> to vector<8x256xbf16>
    %cst_31 = arith.constant dense<0.000000e+00> : vector<8x256xf32>
    %58 = tpu.matmul %57, %56, %cst_31 {dimension_numbers = #tpu.dot_dimension_numbers<[1], [0], [0], [1], [0, 0, 1, 1], [], []>} : vector<8x256xbf16>, vector<256x256xbf16>, vector<8x256xf32> -> vector<8x256xf32>
    %c3 = arith.constant 3 : index
    %c0_32 = arith.constant 0 : index
    %59 = vector.load %arg5[%c3, %c0_32] : memref<12x512xf32, #tpu.memory_space<vmem>>, vector<1x256xf32>
    %60 = vector.broadcast %59 : vector<1x256xf32> to vector<8x256xf32>
    %61 = arith.addf %58, %60 : vector<8x256xf32>
    %c768 = arith.constant 768 : index
    %c0_33 = arith.constant 0 : index
    %62 = vector.load %arg7[%c768, %c0_33] : memref<2304x256xbf16, #tpu.memory_space<vmem>>, vector<512x256xbf16>
    %63 = arith.truncf %44 : vector<8x512xf32> to vector<8x512xbf16>
    %cst_34 = arith.constant dense<0.000000e+00> : vector<8x256xf32>
    %64 = tpu.matmul %63, %62, %cst_34 {dimension_numbers = #tpu.dot_dimension_numbers<[1], [0], [0], [1], [0, 0, 1, 1], [], []>} : vector<8x512xbf16>, vector<512x256xbf16>, vector<8x256xf32> -> vector<8x256xf32>
    %c6 = arith.constant 6 : index
    %c0_35 = arith.constant 0 : index
    %65 = vector.load %arg5[%c6, %c0_35] : memref<12x512xf32, #tpu.memory_space<vmem>>, vector<1x256xf32>
    %66 = vector.broadcast %65 : vector<1x256xf32> to vector<8x256xf32>
    %67 = arith.addf %64, %66 : vector<8x256xf32>
    %cst_36 = arith.constant 0.000000e+00 : f32
    %68 = vector.broadcast %cst_36 : f32 to vector<8x256xf32>
    %69 = arith.cmpf ogt, %67, %68 : vector<8x256xf32>
    %cst_37 = arith.constant 0.00999999977 : f32
    %70 = vector.broadcast %cst_37 : f32 to vector<8x256xf32>
    %71 = arith.mulf %70, %67 : vector<8x256xf32>
    %72 = arith.select %69, %67, %71 : vector<8x256xi1>, vector<8x256xf32>
    %c1280 = arith.constant 1280 : index
    %c0_38 = arith.constant 0 : index
    %73 = vector.load %arg7[%c1280, %c0_38] : memref<2304x256xbf16, #tpu.memory_space<vmem>>, vector<256x256xbf16>
    %74 = arith.truncf %72 : vector<8x256xf32> to vector<8x256xbf16>
    %cst_39 = arith.constant dense<0.000000e+00> : vector<8x256xf32>
    %75 = tpu.matmul %74, %73, %cst_39 {dimension_numbers = #tpu.dot_dimension_numbers<[1], [0], [0], [1], [0, 0, 1, 1], [], []>} : vector<8x256xbf16>, vector<256x256xbf16>, vector<8x256xf32> -> vector<8x256xf32>
    %c7 = arith.constant 7 : index
    %c0_40 = arith.constant 0 : index
    %76 = vector.load %arg5[%c7, %c0_40] : memref<12x512xf32, #tpu.memory_space<vmem>>, vector<1x256xf32>
    %77 = vector.broadcast %76 : vector<1x256xf32> to vector<8x256xf32>
    %78 = arith.addf %75, %77 : vector<8x256xf32>
    %c80 = arith.constant 80 : index
    %c0_41 = arith.constant 0 : index
    %79 = vector.load %arg2[%c80, %c0_41] : memref<592x512xbf16, #tpu.memory_space<vmem>>, vector<256x512xbf16>
    %80 = arith.truncf %61 : vector<8x256xf32> to vector<8x256xbf16>
    %cst_42 = arith.constant dense<0.000000e+00> : vector<8x512xf32>
    %81 = tpu.matmul %80, %79, %cst_42 {dimension_numbers = #tpu.dot_dimension_numbers<[1], [0], [0], [1], [0, 0, 1, 1], [], []>} : vector<8x256xbf16>, vector<256x512xbf16>, vector<8x512xf32> -> vector<8x512xf32>
    %c336 = arith.constant 336 : index
    %c0_43 = arith.constant 0 : index
    %82 = vector.load %arg2[%c336, %c0_43] : memref<592x512xbf16, #tpu.memory_space<vmem>>, vector<256x512xbf16>
    %83 = arith.truncf %78 : vector<8x256xf32> to vector<8x256xbf16>
    %cst_44 = arith.constant dense<0.000000e+00> : vector<8x512xf32>
    %84 = tpu.matmul %83, %82, %cst_44 {dimension_numbers = #tpu.dot_dimension_numbers<[1], [0], [0], [1], [0, 0, 1, 1], [], []>} : vector<8x256xbf16>, vector<256x512xbf16>, vector<8x512xf32> -> vector<8x512xf32>
    %85 = arith.addf %81, %84 : vector<8x512xf32>
    %c8 = arith.constant 8 : index
    %c0_45 = arith.constant 0 : index
    %86 = vector.load %arg5[%c8, %c0_45] : memref<12x512xf32, #tpu.memory_space<vmem>>, vector<1x512xf32>
    %87 = vector.broadcast %86 : vector<1x512xf32> to vector<8x512xf32>
    %88 = arith.addf %85, %87 : vector<8x512xf32>
    %cst_46 = arith.constant 0.000000e+00 : f32
    %89 = vector.broadcast %cst_46 : f32 to vector<8x512xf32>
    %90 = arith.cmpf ogt, %88, %89 : vector<8x512xf32>
    %cst_47 = arith.constant 0.00999999977 : f32
    %91 = vector.broadcast %cst_47 : f32 to vector<8x512xf32>
    %92 = arith.mulf %91, %88 : vector<8x512xf32>
    %93 = arith.select %90, %88, %92 : vector<8x512xi1>, vector<8x512xf32>
    %c1536 = arith.constant 1536 : index
    %c0_48 = arith.constant 0 : index
    %94 = vector.load %arg7[%c1536, %c0_48] : memref<2304x256xbf16, #tpu.memory_space<vmem>>, vector<512x256xbf16>
    %95 = arith.truncf %93 : vector<8x512xf32> to vector<8x512xbf16>
    %cst_49 = arith.constant dense<0.000000e+00> : vector<8x256xf32>
    %96 = tpu.matmul %95, %94, %cst_49 {dimension_numbers = #tpu.dot_dimension_numbers<[1], [0], [0], [1], [0, 0, 1, 1], [], []>} : vector<8x512xbf16>, vector<512x256xbf16>, vector<8x256xf32> -> vector<8x256xf32>
    %c9 = arith.constant 9 : index
    %c0_50 = arith.constant 0 : index
    %97 = vector.load %arg5[%c9, %c0_50] : memref<12x512xf32, #tpu.memory_space<vmem>>, vector<1x256xf32>
    %98 = vector.broadcast %97 : vector<1x256xf32> to vector<8x256xf32>
    %99 = arith.addf %96, %98 : vector<8x256xf32>
    %cst_51 = arith.constant 0.000000e+00 : f32
    %100 = vector.broadcast %cst_51 : f32 to vector<8x256xf32>
    %101 = arith.cmpf ogt, %99, %100 : vector<8x256xf32>
    %cst_52 = arith.constant 0.00999999977 : f32
    %102 = vector.broadcast %cst_52 : f32 to vector<8x256xf32>
    %103 = arith.mulf %102, %99 : vector<8x256xf32>
    %104 = arith.select %101, %99, %103 : vector<8x256xi1>, vector<8x256xf32>
    %c2048 = arith.constant 2048 : index
    %c0_53 = arith.constant 0 : index
    %105 = vector.load %arg7[%c2048, %c0_53] : memref<2304x256xbf16, #tpu.memory_space<vmem>>, vector<256x256xbf16>
    %106 = arith.truncf %104 : vector<8x256xf32> to vector<8x256xbf16>
    %cst_54 = arith.constant dense<0.000000e+00> : vector<8x256xf32>
    %107 = tpu.matmul %106, %105, %cst_54 {dimension_numbers = #tpu.dot_dimension_numbers<[1], [0], [0], [1], [0, 0, 1, 1], [], []>} : vector<8x256xbf16>, vector<256x256xbf16>, vector<8x256xf32> -> vector<8x256xf32>
    %c10 = arith.constant 10 : index
    %c0_55 = arith.constant 0 : index
    %108 = vector.load %arg5[%c10, %c0_55] : memref<12x512xf32, #tpu.memory_space<vmem>>, vector<1x256xf32>
    %109 = vector.broadcast %108 : vector<1x256xf32> to vector<8x256xf32>
    %110 = arith.addf %107, %109 : vector<8x256xf32>
    %cst_56 = arith.constant 0.000000e+00 : f32
    %111 = vector.broadcast %cst_56 : f32 to vector<8x256xf32>
    %112 = arith.cmpf ogt, %110, %111 : vector<8x256xf32>
    %cst_57 = arith.constant 0.00999999977 : f32
    %113 = vector.broadcast %cst_57 : f32 to vector<8x256xf32>
    %114 = arith.mulf %113, %110 : vector<8x256xf32>
    %115 = arith.select %112, %110, %114 : vector<8x256xi1>, vector<8x256xf32>
    %c80_58 = arith.constant 80 : index
    %c0_59 = arith.constant 0 : index
    %116 = vector.load %arg4[%c80_58, %c0_59] : memref<336x128xbf16, #tpu.memory_space<vmem>>, vector<256x128xbf16>
    %117 = arith.truncf %115 : vector<8x256xf32> to vector<8x256xbf16>
    %cst_60 = arith.constant dense<0.000000e+00> : vector<8x128xf32>
    %118 = tpu.matmul %117, %116, %cst_60 {dimension_numbers = #tpu.dot_dimension_numbers<[1], [0], [0], [1], [0, 0, 1, 1], [], []>} : vector<8x256xbf16>, vector<256x128xbf16>, vector<8x128xf32> -> vector<8x128xf32>
    %c11 = arith.constant 11 : index
    %c0_61 = arith.constant 0 : index
    %119 = vector.load %arg5[%c11, %c0_61] : memref<12x512xf32, #tpu.memory_space<vmem>>, vector<1x128xf32>
    %120 = vector.broadcast %119 : vector<1x128xf32> to vector<8x128xf32>
    %121 = arith.addf %118, %120 : vector<8x128xf32>
    %122 = tpu.iota {dimensions = array<i32: 1>} : vector<8x128xi32>
    %c65_i32 = arith.constant 65 : i32
    %123 = vector.broadcast %c65_i32 : i32 to vector<8x128xi32>
    %124 = arith.cmpi slt, %122, %123 : vector<8x128xi32>
    %cst_62 = arith.constant 0xFF800000 : f32
    %125 = vector.broadcast %cst_62 : f32 to vector<8x128xf32>
    %126 = arith.select %124, %121, %125 : vector<8x128xi1>, vector<8x128xf32>
    %cst_63 = arith.constant dense<0xFF800000> : vector<8xf32>
    %127 = vector.multi_reduction <maximumf>, %126, %cst_63 [1] : vector<8x128xf32> to vector<8xf32>
    %128 = vector.shape_cast %127 : vector<8xf32> to vector<8x1xf32>
    %129 = vector.broadcast %128 : vector<8x1xf32> to vector<8x128xf32>
    %130 = arith.subf %126, %129 : vector<8x128xf32>
    %131 = math.exp %130 : vector<8x128xf32>
    %cst_64 = arith.constant dense<0.000000e+00> : vector<8xf32>
    %132 = vector.multi_reduction <add>, %131, %cst_64 [1] : vector<8x128xf32> to vector<8xf32>
    %133 = vector.shape_cast %132 : vector<8xf32> to vector<8x1xf32>
    %134 = vector.broadcast %133 : vector<8x1xf32> to vector<8x128xf32>
    %135 = arith.divf %131, %134 : vector<8x128xf32>
    %c0_65 = arith.constant 0 : index
    %c0_66 = arith.constant 0 : index
    %136 = vector.load %arg6[%c0_65, %c0_66] : memref<8x128xf32, #tpu.memory_space<vmem>>, vector<8x128xf32>
    tpu.vector_store %arg6[%c0_65, %c0_66], %135 {strides = array<i32>} : memref<8x128xf32, #tpu.memory_space<vmem>>, vector<8x128xf32>,
    return
  }
  func.func @transform_0(%arg0: i32) -> (i32, i32) {
    %c0_i32 = arith.constant 0 : i32
    %c0_i32_0 = arith.constant 0 : i32
    return %arg0, %c0_i32 : i32, i32
  }
  func.func @transform_1(%arg0: i32) -> (i32, i32) {
    %c0_i32 = arith.constant 0 : i32
    %c0_i32_0 = arith.constant 0 : i32
    %c0_i32_1 = arith.constant 0 : i32
    return %c0_i32, %c0_i32_0 : i32, i32
  }
  func.func @transform_3(%arg0: i32) -> (i32, i32) {
    %c0_i32 = arith.constant 0 : i32
    %c0_i32_0 = arith.constant 0 : i32
    %c0_i32_1 = arith.constant 0 : i32
    return %c0_i32, %c0_i32_0 : i32, i32
  }
  func.func @transform_4(%arg0: i32) -> (i32, i32) {
    %c0_i32 = arith.constant 0 : i32
    %c0_i32_0 = arith.constant 0 : i32
    %c0_i32_1 = arith.constant 0 : i32
    return %c0_i32, %c0_i32_0 : i32, i32
  }
  func.func @transform_5(%arg0: i32) -> (i32, i32) {
    %c0_i32 = arith.constant 0 : i32
    %c0_i32_0 = arith.constant 0 : i32
    return %arg0, %c0_i32 : i32, i32
  }
}

</mosaic_0001>

<llo_original>
// kernel: tpu_custom_call.1
$region0: #{tpu_custom_call.1}
  #allocation0 [shape = 'u32[]', space=smem, size = 0x4, offset = 0x4, fixed_abs, tag = 'smem constant byte address 0x4 - core index']
  #allocation1 [shape = 'u32[144,128]{1,0:T(1,128)}', space=vmem, size = 0x12000, scoped, tag = 'internal scratch']
  #allocation2 [shape = 'bf16[2304,256]{1,0:T(16,128)(2,1)}', space=vmem, size = 0x120000, scoped, tag = 'scratch operand']
  #allocation3 [shape = 's32[1]{0}', space=sflag, size = 0x4, scoped, tag = 'scratch operand']
  #allocation13 [shape = 's32[]', space=sflag, size = 0x4, offset = 0, fixed_abs, tag = 'sflag constant byte address 0x0 - dummy sync flag']
  %s0 = inlined_call_operand.hbm [shape: bf16[8,80], index: 0, kind: input, shape index: {}]
  %s1 = inlined_call_operand.hbm [shape: bf16[592,512], index: 1, kind: input, shape index: {}]
  %s2 = inlined_call_operand.hbm [shape: bf16[2304,256], index: 2, kind: input, shape index: {}]
  %s3 = inlined_call_operand.hbm [shape: bf16[336,128], index: 3, kind: input, shape index: {}]
  %s4 = inlined_call_operand.hbm [shape: f32[12,512], index: 4, kind: input, shape index: {}]
  %s5 = inlined_call_operand.hbm [shape: f32[8,128], index: 5, kind: output, shape index: {}]
  %s6 = sld [smem:[#allocation0]]
  $region42: #{tpu_custom_call.1} parent=0
    _
  %s8 = ssub.s32 1, %s6
  %s9 = scalar_select 0, %s8, %s6
  $region1: #{tpu_custom_call.1} parent=0
    #allocation4 [shape = 'u8[2048]{0}', space=vmem, size = 0x800, scoped, tag = 'input window, operand 0, single buffered']
    #allocation5 [shape = 's32[1]{0}', space=sflag, size = 0x4, scoped, tag = 'scoped memory for tpu_custom_call.1']
    #allocation6 [shape = 's32[1]{0}', space=sflag, size = 0x4, scoped, tag = 'scoped memory for tpu_custom_call.1']
    #allocation7 [shape = 'u8[606208]{0}', space=vmem, size = 0x94000, scoped, tag = 'input window, operand 1, single buffered']
    #allocation8 [shape = 's32[1]{0}', space=sflag, size = 0x4, scoped, tag = 'scoped memory for tpu_custom_call.1']
    #allocation9 [shape = 'u8[86016]{0}', space=vmem, size = 0x15000, scoped, tag = 'input window, operand 3, single buffered']
    #allocation10 [shape = 'u8[32768]{0}', space=vmem, size = 0x8000, scoped, tag = 'input window, operand 4, single buffered']
    #allocation11 [shape = 's32[1]{0}', space=sflag, size = 0x4, scoped, tag = 'scoped memory for tpu_custom_call.1']
    #allocation12 [shape = 'u8[4096]{0}', space=vmem, size = 0x1000, scoped, tag = 'output window, operand 0, single buffered']
    #allocation14 [shape = 'u32[9]{0}', space=smem, size = 0x24, scoped, tag = 'DMA stride descriptor']
    %10 = vsyncpa [#allocation5], 0
    %11 = vsyncpa [#allocation8], 0
    %12 = vsyncpa [#allocation11], 0
    %13 = vsyncpa [#allocation6], 0
    // Predicated region
    $region2: #{tpu_custom_call.1} parent=1 // pred_check
      _
    $region3: #{tpu_custom_call.1} parent=1 // pred_check_branch
      %15 = sbr.rel (0) target = $region5
    $region4: #{tpu_custom_call.1} parent=1 // pred_region
      %s17 = ssub.s32 64, 64
      %18 = vsyncadd [#allocation5], %s17
      %s20 = sshll.u32 [#allocation4], 4
      %s21 = int_to_ptr.vmem [resolvable:$true] %s20
      %23 = dma.hbm_to_vmem [thread:$0]  %s0, 64, %s21, [#allocation5]
    $region5: #{tpu_custom_call.1} parent=1 // pred_fallthru
      _
    // Predicated region
    $region6: #{tpu_custom_call.1} parent=1 // pred_check
      _
    $region7: #{tpu_custom_call.1} parent=1 // pred_check_branch
      %25 = sbr.rel (0) target = $region9
    $region8: #{tpu_custom_call.1} parent=1 // pred_region
      %s27 = ssub.s32 18944, 18944
      %28 = vsyncadd [#allocation8], %s27
      %s29 = sshll.u32 [#allocation7], 4
      %s30 = int_to_ptr.vmem [resolvable:$true] %s29
      %35 = dma.hbm_to_vmem [thread:$0]  %s1, 18944, %s30, [#allocation8], 256, 256, 16
    $region9: #{tpu_custom_call.1} parent=1 // pred_fallthru
      _
    // Predicated region
    $region10: #{tpu_custom_call.1} parent=1 // pred_check
      _
    $region11: #{tpu_custom_call.1} parent=1 // pred_check_branch
      %37 = sbr.rel (0) target = $region13
    $region12: #{tpu_custom_call.1} parent=1 // pred_region
      %s39 = ssub.s32 2688, 2688
      %40 = vsyncadd [#allocation8], %s39
      %s41 = sshll.u32 [#allocation9], 4
      %s42 = int_to_ptr.vmem [resolvable:$true] %s41
      %47 = dma.hbm_to_vmem [thread:$0]  %s3, 2688, %s42, [#allocation8], 64, 64, 4
    $region13: #{tpu_custom_call.1} parent=1 // pred_fallthru
      _
    // Predicated region
    $region14: #{tpu_custom_call.1} parent=1 // pred_check
      _
    $region15: #{tpu_custom_call.1} parent=1 // pred_check_branch
      %49 = sbr.rel (0) target = $region17
    $region16: #{tpu_custom_call.1} parent=1 // pred_region
      %s51 = ssub.s32 1024, 1024
      %52 = vsyncadd [#allocation11], %s51
      %s53 = sshll.u32 [#allocation10], 4
      %s54 = int_to_ptr.vmem [resolvable:$true] %s53
      %59 = dma.hbm_to_vmem [thread:$0]  %s4, 1024, %s54, [#allocation11], 512, 512, 32
    $region17: #{tpu_custom_call.1} parent=1 // pred_fallthru
      _
    // Predicated region
    $region18: #{tpu_custom_call.1} parent=1 // pred_check
      _
    $region19: #{tpu_custom_call.1} parent=1 // pred_check_branch
      %61 = sbr.rel (0) target = $region21
    $region20: #{tpu_custom_call.1} parent=1 // pred_region
      %62 = dma.done [#allocation5], 64
    $region21: #{tpu_custom_call.1} parent=1 // pred_fallthru
      _
    // Predicated region
    $region22: #{tpu_custom_call.1} parent=1 // pred_check
      _
    $region23: #{tpu_custom_call.1} parent=1 // pred_check_branch
      %64 = sbr.rel (0) target = $region25
    $region24: #{tpu_custom_call.1} parent=1 // pred_region
      %65 = dma.done [#allocation8], 18944
    $region25: #{tpu_custom_call.1} parent=1 // pred_fallthru
      _
    // Predicated region
    $region26: #{tpu_custom_call.1} parent=1 // pred_check
      _
    $region27: #{tpu_custom_call.1} parent=1 // pred_check_branch
      %67 = sbr.rel (0) target = $region29
    $region28: #{tpu_custom_call.1} parent=1 // pred_region
      %68 = dma.done [#allocation8], 2688
    $region29: #{tpu_custom_call.1} parent=1 // pred_fallthru
      _
    // Predicated region
    $region30: #{tpu_custom_call.1} parent=1 // pred_check
      _
    $region31: #{tpu_custom_call.1} parent=1 // pred_check_branch
      %70 = sbr.rel (0) target = $region33
    $region32: #{tpu_custom_call.1} parent=1 // pred_region
      %71 = dma.done [#allocation11], 1024
    $region33: #{tpu_custom_call.1} parent=1 // pred_fallthru
      _
    %s74 = sshll.u32 1, 14
    %s75 = sxor.u32 4294967295, %s74
    %s77 = sld [smem:[#allocation0]]
    %s78 = sadd.s32 2, %s77
    %s80 = sshll.u32 7, 26
    %s81 = sxor.u32 4294967295, %s80
    %s82 = sand.u32 0, %s81
    %s83 = sshll.u32 %s78, 26
    %s84 = sor.u32 %s82, %s83
    %s85 = sshll.u32 [#allocation2], 4
    %s86 = int_to_ptr.vmem [resolvable:$true] %s85
    %89 = sst [smem:[#allocation14]] 256
    %s90 = scalar_lea.smem [#allocation14], 1
    %91 = sst [smem:[%s90]] 256
    %s92 = scalar_lea.smem [#allocation14], 2
    %93 = sst [smem:[%s92]] 2
    %s94 = scalar_lea.smem [#allocation14], 3
    %95 = sst [smem:[%s94]] 64
    %s96 = scalar_lea.smem [#allocation14], 4
    %97 = sst [smem:[%s96]] 128
    %s98 = scalar_lea.smem [#allocation14], 5
    %99 = sst [smem:[%s98]] 2
    %s100 = scalar_lea.smem [#allocation14], 6
    %101 = sst [smem:[%s100]] 128
    %s102 = scalar_lea.smem [#allocation14], 7
    %103 = sst [smem:[%s102]] 64
    %s104 = scalar_lea.smem [#allocation14], 8
    %105 = sst [smem:[%s104]] 4
    %107 = dma.general %s2, 36864, %s86, [#allocation3], [#allocation13], [#allocation14], %s84, 0
    %v108 = vld [vmem:[#allocation4] sm:$0xf]
    %v109 = vld [vmem:[#allocation9] sm:$0xf]
    %v110 = vld [vmem:[#allocation9 + $0x4] sm:$0xf]
    %v111 = vld [vmem:[#allocation9 + $0x8] sm:$0xf]
    %v112 = vld [vmem:[#allocation9 + $0xc] sm:$0xf]
    %v113 = vld [vmem:[#allocation9 + $0x10] sm:$0xf]
    %v114 = vld [vmem:[#allocation9 + $0x14] sm:$0xf]
    %v115 = vld [vmem:[#allocation10] ss:$0 sm:$0xff]
    %v122 = vunpack.c.l.b16 %v109
    %v123 = vunpack.c.l.b16 %v110
    %v124 = vunpack.c.l.b16 %v111
    %v125 = vunpack.c.l.b16 %v112
    %v126 = vunpack.c.l.b16 %v113
    %v127 = vunpack.c.l.b16 %v114
    %v128 = vpack.c.b16 %v123, %v122
    %v129 = vpack.c.b16 %v125, %v124
    %v130 = vpack.c.b16 %v127, %v126
    %vm134 = vcmask 392192
    %v136 = vsel %vm134, %v108, 0
    %138 = vmatprep.subr.bf16.mxu0 0
    %139 = vmatpush1.bf16.msra.mxu0 %v128
    %140 = vmatprep.subr.bf16.mxu0 0
    %141 = vmatpush1.bf16.msra.mxu0 %v129
    %142 = vmatprep.subr.bf16.mxu0 0
    %143 = vmatpush1.bf16.msra.mxu0 %v130
    %144 = vmatprep.subr.bf16.mxu0 0
    %145 = vmatpush1.bf16.msra.mxu0 0
    %146 = vmatprep.subr.bf16.mxu0 0
    %147 = vmatpush1.bf16.msra.mxu0 0
    %148 = vmatprep.subr.bf16.mxu0 0
    %149 = vmatpush1.bf16.msra.mxu0 0
    %150 = vmatprep.subr.bf16.mxu0 0
    %151 = vmatpush1.bf16.msra.mxu0 0
    %152 = vmatprep.subr.bf16.mxu0 0
    %153 = vmatpush1.bf16.msra.mxu0 0
    %154 = vmatprep.subr.bf16.mxu0 0
    %155 = vmatpush1.bf16.msra.mxu0 0
    %156 = vmatprep.subr.bf16.mxu0 0
    %157 = vmatpush1.bf16.msra.mxu0 0
    %158 = vmatprep.subr.bf16.mxu0 0
    %159 = vmatpush1.bf16.msra.mxu0 0
    %160 = vmatprep.subr.bf16.mxu0 0
    %161 = vmatpush1.bf16.msra.mxu0 0
    %162 = vmatprep.subr.bf16.mxu0 0
    %163 = vmatpush1.bf16.msra.mxu0 0
    %164 = vmatprep.subr.bf16.mxu0 0
    %165 = vmatpush1.bf16.msra.mxu0 0
    %166 = vmatprep.subr.bf16.mxu0 0
    %167 = vmatpush1.bf16.msra.mxu0 0
    %168 = vmatprep.subr.bf16.mxu0 0
    %169 = vmatpush1.bf16.msra.mxu0 0
    %170 = vmatprep.mubr.bf16.mxu0 0
    %171 = vmatmul.mubr.bf16.gmra.mrb[0].mxu0 %v136
    %v172 = vpop.f32.mrb[0].mxu0
    %v173 = vadd.f32 %v115, %v172
    %v174 = vpop.f32.mrb[0].mxu0
    %v175 = vpop.f32.mrb[0].mxu0
    %v176 = vpop.f32.mrb[0].mxu0
    %177 = vdwg.mxu0
    %vm178 = vcmp.gt.f32.partialorder %v173, 0.0
    %v179 = vmul.f32 %v173, 0.01
    %v180 = vsel %vm178, %v173, %v179
    %v181 = vld [vmem:[#allocation9 + $0x18] sm:$0xf]
    %v182 = vld [vmem:[#allocation9 + $0x1c] sm:$0xf]
    %v183 = vld [vmem:[#allocation9 + $0x20] sm:$0xf]
    %v184 = vld [vmem:[#allocation9 + $0x24] sm:$0xf]
    %v185 = vld [vmem:[#allocation10 + $0x4] ss:$0 sm:$0xff]
    %v187 = vunpack.c.l.b16 %v108
    %v188 = vpack.c.b16 %v187, %v187
    %189 = vrot.lane.b32.xlu0 %v188, 80
    %v190 = vpop.permute.xlu0 %189
    %v195 = vunpack.c.l.b16 %v181
    %v196 = vunpack.c.l.b16 %v182
    %v197 = vunpack.c.l.b16 %v183
    %v198 = vunpack.c.l.b16 %v184
    %v199 = vpack.c.b16 %v196, %v195
    %v200 = vpack.c.b16 %v198, %v197
    %vm203 = vcmask 261120
    %v205 = vsel %vm203, %v190, 0
    %207 = vmatprep.subr.bf16.mxu0 0
    %208 = vmatpush1.bf16.msra.mxu0 %v199
    %209 = vmatprep.subr.bf16.mxu0 0
    %210 = vmatpush1.bf16.msra.mxu0 %v200
    %211 = vmatprep.subr.bf16.mxu0 0
    %212 = vmatpush1.bf16.msra.mxu0 0
    %213 = vmatprep.subr.bf16.mxu0 0
    %214 = vmatpush1.bf16.msra.mxu0 0
    %215 = vmatprep.subr.bf16.mxu0 0
    %216 = vmatpush1.bf16.msra.mxu0 0
    %217 = vmatprep.subr.bf16.mxu0 0
    %218 = vmatpush1.bf16.msra.mxu0 0
    %219 = vmatprep.subr.bf16.mxu0 0
    %220 = vmatpush1.bf16.msra.mxu0 0
    %221 = vmatprep.subr.bf16.mxu0 0
    %222 = vmatpush1.bf16.msra.mxu0 0
    %223 = vmatprep.subr.bf16.mxu0 0
    %224 = vmatpush1.bf16.msra.mxu0 0
    %225 = vmatprep.subr.bf16.mxu0 0
    %226 = vmatpush1.bf16.msra.mxu0 0
    %227 = vmatprep.subr.bf16.mxu0 0
    %228 = vmatpush1.bf16.msra.mxu0 0
    %229 = vmatprep.subr.bf16.mxu0 0
    %230 = vmatpush1.bf16.msra.mxu0 0
    %231 = vmatprep.subr.bf16.mxu0 0
    %232 = vmatpush1.bf16.msra.mxu0 0
    %233 = vmatprep.subr.bf16.mxu0 0
    %234 = vmatpush1.bf16.msra.mxu0 0
    %235 = vmatprep.subr.bf16.mxu0 0
    %236 = vmatpush1.bf16.msra.mxu0 0
    %237 = vmatprep.subr.bf16.mxu0 0
    %238 = vmatpush1.bf16.msra.mxu0 0
    %239 = vmatprep.mubr.bf16.mxu0 0
    %240 = vmatmul.mubr.bf16.gmra.mrb[0].mxu0 %v205
    %v241 = vpop.f32.mrb[0].mxu0
    %v242 = vadd.f32 %v185, %v241
    %v243 = vpop.f32.mrb[0].mxu0
    %v244 = vpop.f32.mrb[0].mxu0
    %v245 = vpop.f32.mrb[0].mxu0
    %246 = vdwg.mxu0
    %vm247 = vcmp.gt.f32.partialorder %v242, 0.0
    %v248 = vmul.f32 %v242, 0.01
    %v249 = vsel %vm247, %v242, %v248
    %v250 = vld [vmem:[#allocation7] sm:$0xff]
    %v251 = vld [vmem:[#allocation7 + $0x8] sm:$0xff]
    %v252 = vld [vmem:[#allocation7 + $0x10] sm:$0xff]
    %v253 = vld [vmem:[#allocation7 + $0x18] sm:$0xff]
    %v254 = vld [vmem:[#allocation7 + $0x20] sm:$0xff]
    %v255 = vld [vmem:[#allocation7 + $0x28] sm:$0xff]
    %v256 = vld [vmem:[#allocation7 + $0x30] sm:$0xff]
    %v257 = vld [vmem:[#allocation7 + $0x38] sm:$0xff]
    %v258 = vld [vmem:[#allocation7 + $0x40] sm:$0xff]
    %v259 = vld [vmem:[#allocation7 + $0x48] sm:$0xff]
    %v260 = vld [vmem:[#allocation7 + $0x50] sm:$0xff]
    %v261 = vld [vmem:[#allocation7 + $0x58] sm:$0xff]
    %v262 = vpack.c.bf16 %v180, %v180
    %s263 = scalar_lea.vmem [#allocation10], 1
    %v264 = vld [vmem:[%s263] ss:$8 sm:$0xf]
    %v266 = vlaneseq
    %v267 = vshrl.u32 %v266, 7
    %v268 = vsub.s32 0, %v267
    %v269 = vrot.slane %v264, %v268
    %v270 = vlaneseq
    %v271 = vshrl.u32 %v270, 7
    %v272 = vsub.s32 1, %v271
    %v273 = vrot.slane %v264, %v272
    %v274 = vlaneseq
    %v275 = vshrl.u32 %v274, 7
    %v276 = vsub.s32 2, %v275
    %v277 = vrot.slane %v264, %v276
    %v278 = vlaneseq
    %v279 = vshrl.u32 %v278, 7
    %v280 = vsub.s32 3, %v279
    %v281 = vrot.slane %v264, %v280
    %v298 = vunpack.c.l.b16 %v250
    %v299 = vunpack.c.h.b16 %v250
    %v300 = vunpack.c.l.b16 %v251
    %v301 = vunpack.c.h.b16 %v251
    %v302 = vunpack.c.l.b16 %v252
    %v303 = vunpack.c.h.b16 %v252
    %v304 = vunpack.c.l.b16 %v253
    %v305 = vunpack.c.h.b16 %v253
    %v306 = vunpack.c.l.b16 %v254
    %v307 = vunpack.c.h.b16 %v254
    %v308 = vunpack.c.l.b16 %v255
    %v309 = vunpack.c.h.b16 %v255
    %v310 = vunpack.c.l.b16 %v256
    %v311 = vunpack.c.h.b16 %v256
    %v312 = vunpack.c.l.b16 %v257
    %v313 = vunpack.c.h.b16 %v257
    %v314 = vunpack.c.l.b16 %v258
    %v315 = vunpack.c.h.b16 %v258
    %v316 = vunpack.c.l.b16 %v259
    %v317 = vunpack.c.h.b16 %v259
    %v318 = vunpack.c.l.b16 %v260
    %v319 = vunpack.c.h.b16 %v260
    %v320 = vunpack.c.l.b16 %v261
    %v321 = vunpack.c.h.b16 %v261
    %v322 = vpack.c.b16 %v302, %v298
    %v323 = vpack.c.b16 %v303, %v299
    %v324 = vpack.c.b16 %v304, %v300
    %v325 = vpack.c.b16 %v305, %v301
    %v326 = vpack.c.b16 %v310, %v306
    %v327 = vpack.c.b16 %v311, %v307
    %v328 = vpack.c.b16 %v312, %v308
    %v329 = vpack.c.b16 %v313, %v309
    %v330 = vpack.c.b16 %v318, %v314
    %v331 = vpack.c.b16 %v319, %v315
    %v332 = vpack.c.b16 %v320, %v316
    %v333 = vpack.c.b16 %v321, %v317
    %v347 = vsel %vm134, %v262, 0
    %349 = vmatprep.subr.bf16.mxu0 %v323
    %350 = vmatpush1.bf16.msra.mxu0 %v322
    %351 = vmatprep.subr.bf16.mxu0 %v327
    %352 = vmatpush1.bf16.msra.mxu0 %v326
    %353 = vmatprep.subr.bf16.mxu0 %v331
    %354 = vmatpush1.bf16.msra.mxu0 %v330
    %355 = vmatprep.subr.bf16.mxu0 0
    %356 = vmatpush1.bf16.msra.mxu0 0
    %357 = vmatprep.subr.bf16.mxu0 0
    %358 = vmatpush1.bf16.msra.mxu0 0
    %359 = vmatprep.subr.bf16.mxu0 0
    %360 = vmatpush1.bf16.msra.mxu0 0
    %361 = vmatprep.subr.bf16.mxu0 0
    %362 = vmatpush1.bf16.msra.mxu0 0
    %363 = vmatprep.subr.bf16.mxu0 0
    %364 = vmatpush1.bf16.msra.mxu0 0
    %365 = vmatprep.subr.bf16.mxu0 0
    %366 = vmatpush1.bf16.msra.mxu0 0
    %367 = vmatprep.subr.bf16.mxu0 0
    %368 = vmatpush1.bf16.msra.mxu0 0
    %369 = vmatprep.subr.bf16.mxu0 0
    %370 = vmatpush1.bf16.msra.mxu0 0
    %371 = vmatprep.subr.bf16.mxu0 0
    %372 = vmatpush1.bf16.msra.mxu0 0
    %373 = vmatprep.subr.bf16.mxu0 0
    %374 = vmatpush1.bf16.msra.mxu0 0
    %375 = vmatprep.subr.bf16.mxu0 0
    %376 = vmatpush1.bf16.msra.mxu0 0
    %377 = vmatprep.subr.bf16.mxu0 0
    %378 = vmatpush1.bf16.msra.mxu0 0
    %379 = vmatprep.subr.bf16.mxu0 0
    %380 = vmatpush1.bf16.msra.mxu0 0
    %381 = vmatprep.mubr.bf16.mxu0 0
    %382 = vmatmul.mubr.bf16.gmra.mrb[0].mxu0 %v347
    %v383 = vpop.f32.mrb[0].mxu0
    %v384 = vadd.f32 %v269, %v383
    %v385 = vpop.f32.mrb[0].mxu0
    %v386 = vadd.f32 %v273, %v385
    %v387 = vpop.f32.mrb[0].mxu0
    %v388 = vpop.f32.mrb[0].mxu0
    %389 = vdwg.mxu0
    %390 = vmatprep.subr.bf16.mxu0 %v325
    %391 = vmatpush1.bf16.msra.mxu0 %v324
    %392 = vmatprep.subr.bf16.mxu0 %v329
    %393 = vmatpush1.bf16.msra.mxu0 %v328
    %394 = vmatprep.subr.bf16.mxu0 %v333
    %395 = vmatpush1.bf16.msra.mxu0 %v332
    %396 = vmatprep.subr.bf16.mxu0 0
    %397 = vmatpush1.bf16.msra.mxu0 0
    %398 = vmatprep.subr.bf16.mxu0 0
    %399 = vmatpush1.bf16.msra.mxu0 0
    %400 = vmatprep.subr.bf16.mxu0 0
    %401 = vmatpush1.bf16.msra.mxu0 0
    %402 = vmatprep.subr.bf16.mxu0 0
    %403 = vmatpush1.bf16.msra.mxu0 0
    %404 = vmatprep.subr.bf16.mxu0 0
    %405 = vmatpush1.bf16.msra.mxu0 0
    %406 = vmatprep.subr.bf16.mxu0 0
    %407 = vmatpush1.bf16.msra.mxu0 0
    %408 = vmatprep.subr.bf16.mxu0 0
    %409 = vmatpush1.bf16.msra.mxu0 0
    %410 = vmatprep.subr.bf16.mxu0 0
    %411 = vmatpush1.bf16.msra.mxu0 0
    %412 = vmatprep.subr.bf16.mxu0 0
    %413 = vmatpush1.bf16.msra.mxu0 0
    %414 = vmatprep.subr.bf16.mxu0 0
    %415 = vmatpush1.bf16.msra.mxu0 0
    %416 = vmatprep.subr.bf16.mxu0 0
    %417 = vmatpush1.bf16.msra.mxu0 0
    %418 = vmatprep.subr.bf16.mxu0 0
    %419 = vmatpush1.bf16.msra.mxu0 0
    %420 = vmatprep.subr.bf16.mxu0 0
    %421 = vmatpush1.bf16.msra.mxu0 0
    %422 = vmatprep.mubr.bf16.mxu0 0
    %423 = vmatmul.mubr.bf16.gmra.mrb[0].mxu0 %v347
    %v424 = vpop.f32.mrb[0].mxu0
    %v425 = vadd.f32 %v277, %v424
    %v426 = vpop.f32.mrb[0].mxu0
    %v427 = vadd.f32 %v281, %v426
    %v428 = vpop.f32.mrb[0].mxu0
    %v429 = vpop.f32.mrb[0].mxu0
    %430 = vdwg.mxu0
    %vm431 = vcmp.gt.f32.partialorder %v384, 0.0
    %vm432 = vcmp.gt.f32.partialorder %v386, 0.0
    %vm433 = vcmp.gt.f32.partialorder %v425, 0.0
    %vm434 = vcmp.gt.f32.partialorder %v427, 0.0
    %v435 = vmul.f32 %v384, 0.01
    %v436 = vmul.f32 %v386, 0.01
    %v437 = vmul.f32 %v425, 0.01
    %v438 = vmul.f32 %v427, 0.01
    %v439 = vsel %vm431, %v384, %v435
    %v440 = vsel %vm432, %v386, %v436
    %v441 = vsel %vm433, %v425, %v437
    %v442 = vsel %vm434, %v427, %v438
    %v443 = vld [vmem:[#allocation7 + $0x60] sm:$0xff]
    %v444 = vld [vmem:[#allocation7 + $0x68] sm:$0xff]
    %v445 = vld [vmem:[#allocation7 + $0x70] sm:$0xff]
    %v446 = vld [vmem:[#allocation7 + $0x78] sm:$0xff]
    %v447 = vld [vmem:[#allocation7 + $0x80] sm:$0xff]
    %v448 = vld [vmem:[#allocation7 + $0x88] sm:$0xff]
    %v449 = vld [vmem:[#allocation7 + $0x90] sm:$0xff]
    %v450 = vld [vmem:[#allocation7 + $0x98] sm:$0xff]
    %v451 = vpack.c.bf16 %v249, %v249
    %s452 = scalar_lea.vmem [#allocation10], 5
    %v453 = vld [vmem:[%s452] ss:$8 sm:$0xf]
    %v455 = vlaneseq
    %v456 = vshrl.u32 %v455, 7
    %v457 = vsub.s32 0, %v456
    %v458 = vrot.slane %v453, %v457
    %v459 = vlaneseq
    %v460 = vshrl.u32 %v459, 7
    %v461 = vsub.s32 1, %v460
    %v462 = vrot.slane %v453, %v461
    %v463 = vlaneseq
    %v464 = vshrl.u32 %v463, 7
    %v465 = vsub.s32 2, %v464
    %v466 = vrot.slane %v453, %v465
    %v467 = vlaneseq
    %v468 = vshrl.u32 %v467, 7
    %v469 = vsub.s32 3, %v468
    %v470 = vrot.slane %v453, %v469
    %v483 = vunpack.c.l.b16 %v443
    %v484 = vunpack.c.h.b16 %v443
    %v485 = vunpack.c.l.b16 %v444
    %v486 = vunpack.c.h.b16 %v444
    %v487 = vunpack.c.l.b16 %v445
    %v488 = vunpack.c.h.b16 %v445
    %v489 = vunpack.c.l.b16 %v446
    %v490 = vunpack.c.h.b16 %v446
    %v491 = vunpack.c.l.b16 %v447
    %v492 = vunpack.c.h.b16 %v447
    %v493 = vunpack.c.l.b16 %v448
    %v494 = vunpack.c.h.b16 %v448
    %v495 = vunpack.c.l.b16 %v449
    %v496 = vunpack.c.h.b16 %v449
    %v497 = vunpack.c.l.b16 %v450
    %v498 = vunpack.c.h.b16 %v450
    %v499 = vpack.c.b16 %v487, %v483
    %v500 = vpack.c.b16 %v488, %v484
    %v501 = vpack.c.b16 %v489, %v485
    %v502 = vpack.c.b16 %v490, %v486
    %v503 = vpack.c.b16 %v495, %v491
    %v504 = vpack.c.b16 %v496, %v492
    %v505 = vpack.c.b16 %v497, %v493
    %v506 = vpack.c.b16 %v498, %v494
    %v516 = vsel %vm203, %v451, 0
    %518 = vmatprep.subr.bf16.mxu0 %v500
    %519 = vmatpush1.bf16.msra.mxu0 %v499
    %520 = vmatprep.subr.bf16.mxu0 %v504
    %521 = vmatpush1.bf16.msra.mxu0 %v503
    %522 = vmatprep.subr.bf16.mxu0 0
    %523 = vmatpush1.bf16.msra.mxu0 0
    %524 = vmatprep.subr.bf16.mxu0 0
    %525 = vmatpush1.bf16.msra.mxu0 0
    %526 = vmatprep.subr.bf16.mxu0 0
    %527 = vmatpush1.bf16.msra.mxu0 0
    %528 = vmatprep.subr.bf16.mxu0 0
    %529 = vmatpush1.bf16.msra.mxu0 0
    %530 = vmatprep.subr.bf16.mxu0 0
    %531 = vmatpush1.bf16.msra.mxu0 0
    %532 = vmatprep.subr.bf16.mxu0 0
    %533 = vmatpush1.bf16.msra.mxu0 0
    %534 = vmatprep.subr.bf16.mxu0 0
    %535 = vmatpush1.bf16.msra.mxu0 0
    %536 = vmatprep.subr.bf16.mxu0 0
    %537 = vmatpush1.bf16.msra.mxu0 0
    %538 = vmatprep.subr.bf16.mxu0 0
    %539 = vmatpush1.bf16.msra.mxu0 0
    %540 = vmatprep.subr.bf16.mxu0 0
    %541 = vmatpush1.bf16.msra.mxu0 0
    %542 = vmatprep.subr.bf16.mxu0 0
    %543 = vmatpush1.bf16.msra.mxu0 0
    %544 = vmatprep.subr.bf16.mxu0 0
    %545 = vmatpush1.bf16.msra.mxu0 0
    %546 = vmatprep.subr.bf16.mxu0 0
    %547 = vmatpush1.bf16.msra.mxu0 0
    %548 = vmatprep.subr.bf16.mxu0 0
    %549 = vmatpush1.bf16.msra.mxu0 0
    %550 = vmatprep.mubr.bf16.mxu0 0
    %551 = vmatmul.mubr.bf16.gmra.mrb[0].mxu0 %v516
    %v552 = vpop.f32.mrb[0].mxu0
    %v553 = vadd.f32 %v458, %v552
    %v554 = vpop.f32.mrb[0].mxu0
    %v555 = vadd.f32 %v462, %v554
    %v556 = vpop.f32.mrb[0].mxu0
    %v557 = vpop.f32.mrb[0].mxu0
    %558 = vdwg.mxu0
    %559 = vmatprep.subr.bf16.mxu0 %v502
    %560 = vmatpush1.bf16.msra.mxu0 %v501
    %561 = vmatprep.subr.bf16.mxu0 %v506
    %562 = vmatpush1.bf16.msra.mxu0 %v505
    %563 = vmatprep.subr.bf16.mxu0 0
    %564 = vmatpush1.bf16.msra.mxu0 0
    %565 = vmatprep.subr.bf16.mxu0 0
    %566 = vmatpush1.bf16.msra.mxu0 0
    %567 = vmatprep.subr.bf16.mxu0 0
    %568 = vmatpush1.bf16.msra.mxu0 0
    %569 = vmatprep.subr.bf16.mxu0 0
    %570 = vmatpush1.bf16.msra.mxu0 0
    %571 = vmatprep.subr.bf16.mxu0 0
    %572 = vmatpush1.bf16.msra.mxu0 0
    %573 = vmatprep.subr.bf16.mxu0 0
    %574 = vmatpush1.bf16.msra.mxu0 0
    %575 = vmatprep.subr.bf16.mxu0 0
    %576 = vmatpush1.bf16.msra.mxu0 0
    %577 = vmatprep.subr.bf16.mxu0 0
    %578 = vmatpush1.bf16.msra.mxu0 0
    %579 = vmatprep.subr.bf16.mxu0 0
    %580 = vmatpush1.bf16.msra.mxu0 0
    %581 = vmatprep.subr.bf16.mxu0 0
    %582 = vmatpush1.bf16.msra.mxu0 0
    %583 = vmatprep.subr.bf16.mxu0 0
    %584 = vmatpush1.bf16.msra.mxu0 0
    %585 = vmatprep.subr.bf16.mxu0 0
    %586 = vmatpush1.bf16.msra.mxu0 0
    %587 = vmatprep.subr.bf16.mxu0 0
    %588 = vmatpush1.bf16.msra.mxu0 0
    %589 = vmatprep.subr.bf16.mxu0 0
    %590 = vmatpush1.bf16.msra.mxu0 0
    %591 = vmatprep.mubr.bf16.mxu0 0
    %592 = vmatmul.mubr.bf16.gmra.mrb[0].mxu0 %v516
    %v593 = vpop.f32.mrb[0].mxu0
    %v594 = vadd.f32 %v466, %v593
    %v595 = vpop.f32.mrb[0].mxu0
    %v596 = vadd.f32 %v470, %v595
    %v597 = vpop.f32.mrb[0].mxu0
    %v598 = vpop.f32.mrb[0].mxu0
    %599 = vdwg.mxu0
    %vm600 = vcmp.gt.f32.partialorder %v553, 0.0
    %vm601 = vcmp.gt.f32.partialorder %v555, 0.0
    %vm602 = vcmp.gt.f32.partialorder %v594, 0.0
    %vm603 = vcmp.gt.f32.partialorder %v596, 0.0
    %v604 = vmul.f32 %v553, 0.01
    %v605 = vmul.f32 %v555, 0.01
    %v606 = vmul.f32 %v594, 0.01
    %v607 = vmul.f32 %v596, 0.01
    %v608 = vsel %vm600, %v553, %v604
    %v609 = vsel %vm601, %v555, %v605
    %v610 = vsel %vm602, %v594, %v606
    %v611 = vsel %vm603, %v596, %v607
    %s612 = smul.u32 4, 288
    %s613 = smul.u32 %s612, 2
    %s614 = sshll.u32 %s613, 4
    %615 = dma.done [#allocation3], %s614
    %v616 = vld [vmem:[#allocation2] sm:$0xff]
    %v617 = vld [vmem:[#allocation2 + $0x8] sm:$0xff]
    %v618 = vld [vmem:[#allocation2 + $0x10] sm:$0xff]
    %v619 = vld [vmem:[#allocation2 + $0x18] sm:$0xff]
    %v620 = vld [vmem:[#allocation2 + $0x20] sm:$0xff]
    %v621 = vld [vmem:[#allocation2 + $0x28] sm:$0xff]
    %v622 = vld [vmem:[#allocation2 + $0x30] sm:$0xff]
    %v623 = vld [vmem:[#allocation2 + $0x38] sm:$0xff]
    %v624 = vld [vmem:[#allocation2 + $0x40] sm:$0xff]
    %v625 = vld [vmem:[#allocation2 + $0x48] sm:$0xff]
    %v626 = vld [vmem:[#allocation2 + $0x50] sm:$0xff]
    %v627 = vld [vmem:[#allocation2 + $0x58] sm:$0xff]
    %v628 = vld [vmem:[#allocation2 + $0x60] sm:$0xff]
    %v629 = vld [vmem:[#allocation2 + $0x68] sm:$0xff]
    %v630 = vld [vmem:[#allocation2 + $0x70] sm:$0xff]
    %v631 = vld [vmem:[#allocation2 + $0x78] sm:$0xff]
    %v632 = vld [vmem:[#allocation2 + $0x80] sm:$0xff]
    %v633 = vld [vmem:[#allocation2 + $0x88] sm:$0xff]
    %v634 = vld [vmem:[#allocation2 + $0x90] sm:$0xff]
    %v635 = vld [vmem:[#allocation2 + $0x98] sm:$0xff]
    %v636 = vld [vmem:[#allocation2 + $0xa0] sm:$0xff]
    %v637 = vld [vmem:[#allocation2 + $0xa8] sm:$0xff]
    %v638 = vld [vmem:[#allocation2 + $0xb0] sm:$0xff]
    %v639 = vld [vmem:[#allocation2 + $0xb8] sm:$0xff]
    %v640 = vld [vmem:[#allocation2 + $0xc0] sm:$0xff]
    %v641 = vld [vmem:[#allocation2 + $0xc8] sm:$0xff]
    %v642 = vld [vmem:[#allocation2 + $0xd0] sm:$0xff]
    %v643 = vld [vmem:[#allocation2 + $0xd8] sm:$0xff]
    %v644 = vld [vmem:[#allocation2 + $0xe0] sm:$0xff]
    %v645 = vld [vmem:[#allocation2 + $0xe8] sm:$0xff]
    %v646 = vld [vmem:[#allocation2 + $0xf0] sm:$0xff]
    %v647 = vld [vmem:[#allocation2 + $0xf8] sm:$0xff]
    %v648 = vld [vmem:[#allocation2 + $0x100] sm:$0xff]
    %v649 = vld [vmem:[#allocation2 + $0x108] sm:$0xff]
    %v650 = vld [vmem:[#allocation2 + $0x110] sm:$0xff]
    %v651 = vld [vmem:[#allocation2 + $0x118] sm:$0xff]
    %v652 = vld [vmem:[#allocation2 + $0x120] sm:$0xff]
    %v653 = vld [vmem:[#allocation2 + $0x128] sm:$0xff]
    %v654 = vld [vmem:[#allocation2 + $0x130] sm:$0xff]
    %v655 = vld [vmem:[#allocation2 + $0x138] sm:$0xff]
    %v656 = vld [vmem:[#allocation2 + $0x140] sm:$0xff]
    %v657 = vld [vmem:[#allocation2 + $0x148] sm:$0xff]
    %v658 = vld [vmem:[#allocation2 + $0x150] sm:$0xff]
    %v659 = vld [vmem:[#allocation2 + $0x158] sm:$0xff]
    %v660 = vld [vmem:[#allocation2 + $0x160] sm:$0xff]
    %v661 = vld [vmem:[#allocation2 + $0x168] sm:$0xff]
    %v662 = vld [vmem:[#allocation2 + $0x170] sm:$0xff]
    %v663 = vld [vmem:[#allocation2 + $0x178] sm:$0xff]
    %v664 = vld [vmem:[#allocation2 + $0x180] sm:$0xff]
    %v665 = vld [vmem:[#allocation2 + $0x188] sm:$0xff]
    %v666 = vld [vmem:[#allocation2 + $0x190] sm:$0xff]
    %v667 = vld [vmem:[#allocation2 + $0x198] sm:$0xff]
    %v668 = vld [vmem:[#allocation2 + $0x1a0] sm:$0xff]
    %v669 = vld [vmem:[#allocation2 + $0x1a8] sm:$0xff]
    %v670 = vld [vmem:[#allocation2 + $0x1b0] sm:$0xff]
    %v671 = vld [vmem:[#allocation2 + $0x1b8] sm:$0xff]
    %v672 = vld [vmem:[#allocation2 + $0x1c0] sm:$0xff]
    %v673 = vld [vmem:[#allocation2 + $0x1c8] sm:$0xff]
    %v674 = vld [vmem:[#allocation2 + $0x1d0] sm:$0xff]
    %v675 = vld [vmem:[#allocation2 + $0x1d8] sm:$0xff]
    %v676 = vld [vmem:[#allocation2 + $0x1e0] sm:$0xff]
    %v677 = vld [vmem:[#allocation2 + $0x1e8] sm:$0xff]
    %v678 = vld [vmem:[#allocation2 + $0x1f0] sm:$0xff]
    %v679 = vld [vmem:[#allocation2 + $0x1f8] sm:$0xff]
    %v680 = vpack.c.bf16 %v439, %v439
    %v681 = vpack.c.bf16 %v440, %v440
    %v682 = vpack.c.bf16 %v441, %v441
    %v683 = vpack.c.bf16 %v442, %v442
    %s684 = scalar_lea.vmem [#allocation10], 2
    %v685 = vld [vmem:[%s684] ss:$8 sm:$0x3]
    %v687 = vlaneseq
    %v688 = vshrl.u32 %v687, 7
    %v689 = vsub.s32 0, %v688
    %v690 = vrot.slane %v685, %v689
    %v691 = vlaneseq
    %v692 = vshrl.u32 %v691, 7
    %v693 = vsub.s32 1, %v692
    %v694 = vrot.slane %v685, %v693
    %697 = vmatprep.subr.bf16.mxu0 %v617
    %698 = vmatpush1.bf16.msra.mxu0 %v616
    %699 = vmatprep.subr.bf16.mxu0 %v619
    %700 = vmatpush1.bf16.msra.mxu0 %v618
    %701 = vmatprep.subr.bf16.mxu0 %v621
    %702 = vmatpush1.bf16.msra.mxu0 %v620
    %703 = vmatprep.subr.bf16.mxu0 %v623
    %704 = vmatpush1.bf16.msra.mxu0 %v622
    %705 = vmatprep.subr.bf16.mxu0 %v625
    %706 = vmatpush1.bf16.msra.mxu0 %v624
    %707 = vmatprep.subr.bf16.mxu0 %v627
    %708 = vmatpush1.bf16.msra.mxu0 %v626
    %709 = vmatprep.subr.bf16.mxu0 %v629
    %710 = vmatpush1.bf16.msra.mxu0 %v628
    %711 = vmatprep.subr.bf16.mxu0 %v631
    %712 = vmatpush1.bf16.msra.mxu0 %v630
    %713 = vmatprep.subr.bf16.mxu0 %v633
    %714 = vmatpush1.bf16.msra.mxu0 %v632
    %715 = vmatprep.subr.bf16.mxu0 %v635
    %716 = vmatpush1.bf16.msra.mxu0 %v634
    %717 = vmatprep.subr.bf16.mxu0 %v637
    %718 = vmatpush1.bf16.msra.mxu0 %v636
    %719 = vmatprep.subr.bf16.mxu0 %v639
    %720 = vmatpush1.bf16.msra.mxu0 %v638
    %721 = vmatprep.subr.bf16.mxu0 %v641
    %722 = vmatpush1.bf16.msra.mxu0 %v640
    %723 = vmatprep.subr.bf16.mxu0 %v643
    %724 = vmatpush1.bf16.msra.mxu0 %v642
    %725 = vmatprep.subr.bf16.mxu0 %v645
    %726 = vmatpush1.bf16.msra.mxu0 %v644
    %727 = vmatprep.subr.bf16.mxu0 %v647
    %728 = vmatpush1.bf16.msra.mxu0 %v646
    %729 = vmatprep.mubr.bf16.mxu0 %v681
    %730 = vmatmul.mubr.bf16.gmra.mrb[0].mxu0 %v680
    %v731 = vpop.f32.mrb[0].mxu0
    %v732 = vadd.f32 %v690, %v731
    %v733 = vpop.f32.mrb[0].mxu0
    %v734 = vadd.f32 %v694, %v733
    %v735 = vpop.f32.mrb[0].mxu0
    %v736 = vpop.f32.mrb[0].mxu0
    %737 = vdwg.mxu0
    %738 = vmatprep.subr.bf16.mxu0 %v649
    %739 = vmatpush1.bf16.msra.mxu0 %v648
    %740 = vmatprep.subr.bf16.mxu0 %v651
    %741 = vmatpush1.bf16.msra.mxu0 %v650
    %742 = vmatprep.subr.bf16.mxu0 %v653
    %743 = vmatpush1.bf16.msra.mxu0 %v652
    %744 = vmatprep.subr.bf16.mxu0 %v655
    %745 = vmatpush1.bf16.msra.mxu0 %v654
    %746 = vmatprep.subr.bf16.mxu0 %v657
    %747 = vmatpush1.bf16.msra.mxu0 %v656
    %748 = vmatprep.subr.bf16.mxu0 %v659
    %749 = vmatpush1.bf16.msra.mxu0 %v658
    %750 = vmatprep.subr.bf16.mxu0 %v661
    %751 = vmatpush1.bf16.msra.mxu0 %v660
    %752 = vmatprep.subr.bf16.mxu0 %v663
    %753 = vmatpush1.bf16.msra.mxu0 %v662
    %754 = vmatprep.subr.bf16.mxu0 %v665
    %755 = vmatpush1.bf16.msra.mxu0 %v664
    %756 = vmatprep.subr.bf16.mxu0 %v667
    %757 = vmatpush1.bf16.msra.mxu0 %v666
    %758 = vmatprep.subr.bf16.mxu0 %v669
    %759 = vmatpush1.bf16.msra.mxu0 %v668
    %760 = vmatprep.subr.bf16.mxu0 %v671
    %761 = vmatpush1.bf16.msra.mxu0 %v670
    %762 = vmatprep.subr.bf16.mxu0 %v673
    %763 = vmatpush1.bf16.msra.mxu0 %v672
    %764 = vmatprep.subr.bf16.mxu0 %v675
    %765 = vmatpush1.bf16.msra.mxu0 %v674
    %766 = vmatprep.subr.bf16.mxu0 %v677
    %767 = vmatpush1.bf16.msra.mxu0 %v676
    %768 = vmatprep.subr.bf16.mxu0 %v679
    %769 = vmatpush1.bf16.msra.mxu0 %v678
    %770 = vmatprep.mubr.bf16.mxu0 %v683
    %771 = vmatmul.mubr.bf16.gmra.mrb[0].mxu0 %v682
    %v772 = vpop.f32.mrb[0].mxu0
    %v773 = vadd.f32 %v732, %v772
    %v774 = vpop.f32.mrb[0].mxu0
    %v775 = vadd.f32 %v734, %v774
    %v776 = vpop.f32.mrb[0].mxu0
    %v777 = vpop.f32.mrb[0].mxu0
    %778 = vdwg.mxu0
    %vm779 = vcmp.gt.f32.partialorder %v773, 0.0
    %vm780 = vcmp.gt.f32.partialorder %v775, 0.0
    %v781 = vmul.f32 %v773, 0.01
    %v782 = vmul.f32 %v775, 0.01
    %v783 = vsel %vm779, %v773, %v781
    %v784 = vsel %vm780, %v775, %v782
    %v785 = vld [vmem:[#allocation2 + $0x200] sm:$0xff]
    %v786 = vld [vmem:[#allocation2 + $0x208] sm:$0xff]
    %v787 = vld [vmem:[#allocation2 + $0x210] sm:$0xff]
    %v788 = vld [vmem:[#allocation2 + $0x218] sm:$0xff]
    %v789 = vld [vmem:[#allocation2 + $0x220] sm:$0xff]
    %v790 = vld [vmem:[#allocation2 + $0x228] sm:$0xff]
    %v791 = vld [vmem:[#allocation2 + $0x230] sm:$0xff]
    %v792 = vld [vmem:[#allocation2 + $0x238] sm:$0xff]
    %v793 = vld [vmem:[#allocation2 + $0x240] sm:$0xff]
    %v794 = vld [vmem:[#allocation2 + $0x248] sm:$0xff]
    %v795 = vld [vmem:[#allocation2 + $0x250] sm:$0xff]
    %v796 = vld [vmem:[#allocation2 + $0x258] sm:$0xff]
    %v797 = vld [vmem:[#allocation2 + $0x260] sm:$0xff]
    %v798 = vld [vmem:[#allocation2 + $0x268] sm:$0xff]
    %v799 = vld [vmem:[#allocation2 + $0x270] sm:$0xff]
    %v800 = vld [vmem:[#allocation2 + $0x278] sm:$0xff]
    %v801 = vld [vmem:[#allocation2 + $0x280] sm:$0xff]
    %v802 = vld [vmem:[#allocation2 + $0x288] sm:$0xff]
    %v803 = vld [vmem:[#allocation2 + $0x290] sm:$0xff]
    %v804 = vld [vmem:[#allocation2 + $0x298] sm:$0xff]
    %v805 = vld [vmem:[#allocation2 + $0x2a0] sm:$0xff]
    %v806 = vld [vmem:[#allocation2 + $0x2a8] sm:$0xff]
    %v807 = vld [vmem:[#allocation2 + $0x2b0] sm:$0xff]
    %v808 = vld [vmem:[#allocation2 + $0x2b8] sm:$0xff]
    %v809 = vld [vmem:[#allocation2 + $0x2c0] sm:$0xff]
    %v810 = vld [vmem:[#allocation2 + $0x2c8] sm:$0xff]
    %v811 = vld [vmem:[#allocation2 + $0x2d0] sm:$0xff]
    %v812 = vld [vmem:[#allocation2 + $0x2d8] sm:$0xff]
    %v813 = vld [vmem:[#allocation2 + $0x2e0] sm:$0xff]
    %v814 = vld [vmem:[#allocation2 + $0x2e8] sm:$0xff]
    %v815 = vld [vmem:[#allocation2 + $0x2f0] sm:$0xff]
    %v816 = vld [vmem:[#allocation2 + $0x2f8] sm:$0xff]
    %v817 = vpack.c.bf16 %v783, %v783
    %v818 = vpack.c.bf16 %v784, %v784
    %s819 = scalar_lea.vmem [#allocation10], 3
    %v820 = vld [vmem:[%s819] ss:$8 sm:$0x3]
    %v822 = vlaneseq
    %v823 = vshrl.u32 %v822, 7
    %v824 = vsub.s32 0, %v823
    %v825 = vrot.slane %v820, %v824
    %v826 = vlaneseq
    %v827 = vshrl.u32 %v826, 7
    %v828 = vsub.s32 1, %v827
    %v829 = vrot.slane %v820, %v828
    %832 = vmatprep.subr.bf16.mxu0 %v786
    %833 = vmatpush1.bf16.msra.mxu0 %v785
    %834 = vmatprep.subr.bf16.mxu0 %v788
    %835 = vmatpush1.bf16.msra.mxu0 %v787
    %836 = vmatprep.subr.bf16.mxu0 %v790
    %837 = vmatpush1.bf16.msra.mxu0 %v789
    %838 = vmatprep.subr.bf16.mxu0 %v792
    %839 = vmatpush1.bf16.msra.mxu0 %v791
    %840 = vmatprep.subr.bf16.mxu0 %v794
    %841 = vmatpush1.bf16.msra.mxu0 %v793
    %842 = vmatprep.subr.bf16.mxu0 %v796
    %843 = vmatpush1.bf16.msra.mxu0 %v795
    %844 = vmatprep.subr.bf16.mxu0 %v798
    %845 = vmatpush1.bf16.msra.mxu0 %v797
    %846 = vmatprep.subr.bf16.mxu0 %v800
    %847 = vmatpush1.bf16.msra.mxu0 %v799
    %848 = vmatprep.subr.bf16.mxu0 %v802
    %849 = vmatpush1.bf16.msra.mxu0 %v801
    %850 = vmatprep.subr.bf16.mxu0 %v804
    %851 = vmatpush1.bf16.msra.mxu0 %v803
    %852 = vmatprep.subr.bf16.mxu0 %v806
    %853 = vmatpush1.bf16.msra.mxu0 %v805
    %854 = vmatprep.subr.bf16.mxu0 %v808
    %855 = vmatpush1.bf16.msra.mxu0 %v807
    %856 = vmatprep.subr.bf16.mxu0 %v810
    %857 = vmatpush1.bf16.msra.mxu0 %v809
    %858 = vmatprep.subr.bf16.mxu0 %v812
    %859 = vmatpush1.bf16.msra.mxu0 %v811
    %860 = vmatprep.subr.bf16.mxu0 %v814
    %861 = vmatpush1.bf16.msra.mxu0 %v813
    %862 = vmatprep.subr.bf16.mxu0 %v816
    %863 = vmatpush1.bf16.msra.mxu0 %v815
    %864 = vmatprep.mubr.bf16.mxu0 %v818
    %865 = vmatmul.mubr.bf16.gmra.mrb[0].mxu0 %v817
    %v866 = vpop.f32.mrb[0].mxu0
    %v867 = vadd.f32 %v825, %v866
    %v868 = vpop.f32.mrb[0].mxu0
    %v869 = vadd.f32 %v829, %v868
    %v870 = vpop.f32.mrb[0].mxu0
    %v871 = vpop.f32.mrb[0].mxu0
    %872 = vdwg.mxu0
    %v873 = vld [vmem:[#allocation2 + $0x300] sm:$0xff]
    %v874 = vld [vmem:[#allocation2 + $0x308] sm:$0xff]
    %v875 = vld [vmem:[#allocation2 + $0x310] sm:$0xff]
    %v876 = vld [vmem:[#allocation2 + $0x318] sm:$0xff]
    %v877 = vld [vmem:[#allocation2 + $0x320] sm:$0xff]
    %v878 = vld [vmem:[#allocation2 + $0x328] sm:$0xff]
    %v879 = vld [vmem:[#allocation2 + $0x330] sm:$0xff]
    %v880 = vld [vmem:[#allocation2 + $0x338] sm:$0xff]
    %v881 = vld [vmem:[#allocation2 + $0x340] sm:$0xff]
    %v882 = vld [vmem:[#allocation2 + $0x348] sm:$0xff]
    %v883 = vld [vmem:[#allocation2 + $0x350] sm:$0xff]
    %v884 = vld [vmem:[#allocation2 + $0x358] sm:$0xff]
    %v885 = vld [vmem:[#allocation2 + $0x360] sm:$0xff]
    %v886 = vld [vmem:[#allocation2 + $0x368] sm:$0xff]
    %v887 = vld [vmem:[#allocation2 + $0x370] sm:$0xff]
    %v888 = vld [vmem:[#allocation2 + $0x378] sm:$0xff]
    %v889 = vld [vmem:[#allocation2 + $0x380] sm:$0xff]
    %v890 = vld [vmem:[#allocation2 + $0x388] sm:$0xff]
    %v891 = vld [vmem:[#allocation2 + $0x390] sm:$0xff]
    %v892 = vld [vmem:[#allocation2 + $0x398] sm:$0xff]
    %v893 = vld [vmem:[#allocation2 + $0x3a0] sm:$0xff]
    %v894 = vld [vmem:[#allocation2 + $0x3a8] sm:$0xff]
    %v895 = vld [vmem:[#allocation2 + $0x3b0] sm:$0xff]
    %v896 = vld [vmem:[#allocation2 + $0x3b8] sm:$0xff]
    %v897 = vld [vmem:[#allocation2 + $0x3c0] sm:$0xff]
    %v898 = vld [vmem:[#allocation2 + $0x3c8] sm:$0xff]
    %v899 = vld [vmem:[#allocation2 + $0x3d0] sm:$0xff]
    %v900 = vld [vmem:[#allocation2 + $0x3d8] sm:$0xff]
    %v901 = vld [vmem:[#allocation2 + $0x3e0] sm:$0xff]
    %v902 = vld [vmem:[#allocation2 + $0x3e8] sm:$0xff]
    %v903 = vld [vmem:[#allocation2 + $0x3f0] sm:$0xff]
    %v904 = vld [vmem:[#allocation2 + $0x3f8] sm:$0xff]
    %v905 = vld [vmem:[#allocation2 + $0x400] sm:$0xff]
    %v906 = vld [vmem:[#allocation2 + $0x408] sm:$0xff]
    %v907 = vld [vmem:[#allocation2 + $0x410] sm:$0xff]
    %v908 = vld [vmem:[#allocation2 + $0x418] sm:$0xff]
    %v909 = vld [vmem:[#allocation2 + $0x420] sm:$0xff]
    %v910 = vld [vmem:[#allocation2 + $0x428] sm:$0xff]
    %v911 = vld [vmem:[#allocation2 + $0x430] sm:$0xff]
    %v912 = vld [vmem:[#allocation2 + $0x438] sm:$0xff]
    %v913 = vld [vmem:[#allocation2 + $0x440] sm:$0xff]
    %v914 = vld [vmem:[#allocation2 + $0x448] sm:$0xff]
    %v915 = vld [vmem:[#allocation2 + $0x450] sm:$0xff]
    %v916 = vld [vmem:[#allocation2 + $0x458] sm:$0xff]
    %v917 = vld [vmem:[#allocation2 + $0x460] sm:$0xff]
    %v918 = vld [vmem:[#allocation2 + $0x468] sm:$0xff]
    %v919 = vld [vmem:[#allocation2 + $0x470] sm:$0xff]
    %v920 = vld [vmem:[#allocation2 + $0x478] sm:$0xff]
    %v921 = vld [vmem:[#allocation2 + $0x480] sm:$0xff]
    %v922 = vld [vmem:[#allocation2 + $0x488] sm:$0xff]
    %v923 = vld [vmem:[#allocation2 + $0x490] sm:$0xff]
    %v924 = vld [vmem:[#allocation2 + $0x498] sm:$0xff]
    %v925 = vld [vmem:[#allocation2 + $0x4a0] sm:$0xff]
    %v926 = vld [vmem:[#allocation2 + $0x4a8] sm:$0xff]
    %v927 = vld [vmem:[#allocation2 + $0x4b0] sm:$0xff]
    %v928 = vld [vmem:[#allocation2 + $0x4b8] sm:$0xff]
    %v929 = vld [vmem:[#allocation2 + $0x4c0] sm:$0xff]
    %v930 = vld [vmem:[#allocation2 + $0x4c8] sm:$0xff]
    %v931 = vld [vmem:[#allocation2 + $0x4d0] sm:$0xff]
    %v932 = vld [vmem:[#allocation2 + $0x4d8] sm:$0xff]
    %v933 = vld [vmem:[#allocation2 + $0x4e0] sm:$0xff]
    %v934 = vld [vmem:[#allocation2 + $0x4e8] sm:$0xff]
    %v935 = vld [vmem:[#allocation2 + $0x4f0] sm:$0xff]
    %v936 = vld [vmem:[#allocation2 + $0x4f8] sm:$0xff]
    %v937 = vpack.c.bf16 %v608, %v608
    %v938 = vpack.c.bf16 %v609, %v609
    %v939 = vpack.c.bf16 %v610, %v610
    %v940 = vpack.c.bf16 %v611, %v611
    %s941 = scalar_lea.vmem [#allocation10], 6
    %v942 = vld [vmem:[%s941] ss:$8 sm:$0x3]
    %v944 = vlaneseq
    %v945 = vshrl.u32 %v944, 7
    %v946 = vsub.s32 0, %v945
    %v947 = vrot.slane %v942, %v946
    %v948 = vlaneseq
    %v949 = vshrl.u32 %v948, 7
    %v950 = vsub.s32 1, %v949
    %v951 = vrot.slane %v942, %v950
    %954 = vmatprep.subr.bf16.mxu0 %v874
    %955 = vmatpush1.bf16.msra.mxu0 %v873
    %956 = vmatprep.subr.bf16.mxu0 %v876
    %957 = vmatpush1.bf16.msra.mxu0 %v875
    %958 = vmatprep.subr.bf16.mxu0 %v878
    %959 = vmatpush1.bf16.msra.mxu0 %v877
    %960 = vmatprep.subr.bf16.mxu0 %v880
    %961 = vmatpush1.bf16.msra.mxu0 %v879
    %962 = vmatprep.subr.bf16.mxu0 %v882
    %963 = vmatpush1.bf16.msra.mxu0 %v881
    %964 = vmatprep.subr.bf16.mxu0 %v884
    %965 = vmatpush1.bf16.msra.mxu0 %v883
    %966 = vmatprep.subr.bf16.mxu0 %v886
    %967 = vmatpush1.bf16.msra.mxu0 %v885
    %968 = vmatprep.subr.bf16.mxu0 %v888
    %969 = vmatpush1.bf16.msra.mxu0 %v887
    %970 = vmatprep.subr.bf16.mxu0 %v890
    %971 = vmatpush1.bf16.msra.mxu0 %v889
    %972 = vmatprep.subr.bf16.mxu0 %v892
    %973 = vmatpush1.bf16.msra.mxu0 %v891
    %974 = vmatprep.subr.bf16.mxu0 %v894
    %975 = vmatpush1.bf16.msra.mxu0 %v893
    %976 = vmatprep.subr.bf16.mxu0 %v896
    %977 = vmatpush1.bf16.msra.mxu0 %v895
    %978 = vmatprep.subr.bf16.mxu0 %v898
    %979 = vmatpush1.bf16.msra.mxu0 %v897
    %980 = vmatprep.subr.bf16.mxu0 %v900
    %981 = vmatpush1.bf16.msra.mxu0 %v899
    %982 = vmatprep.subr.bf16.mxu0 %v902
    %983 = vmatpush1.bf16.msra.mxu0 %v901
    %984 = vmatprep.subr.bf16.mxu0 %v904
    %985 = vmatpush1.bf16.msra.mxu0 %v903
    %986 = vmatprep.mubr.bf16.mxu0 %v938
    %987 = vmatmul.mubr.bf16.gmra.mrb[0].mxu0 %v937
    %v988 = vpop.f32.mrb[0].mxu0
    %v989 = vadd.f32 %v947, %v988
    %v990 = vpop.f32.mrb[0].mxu0
    %v991 = vadd.f32 %v951, %v990
    %v992 = vpop.f32.mrb[0].mxu0
    %v993 = vpop.f32.mrb[0].mxu0
    %994 = vdwg.mxu0
    %995 = vmatprep.subr.bf16.mxu0 %v906
    %996 = vmatpush1.bf16.msra.mxu0 %v905
    %997 = vmatprep.subr.bf16.mxu0 %v908
    %998 = vmatpush1.bf16.msra.mxu0 %v907
    %999 = vmatprep.subr.bf16.mxu0 %v910
    %1000 = vmatpush1.bf16.msra.mxu0 %v909
    %1001 = vmatprep.subr.bf16.mxu0 %v912
    %1002 = vmatpush1.bf16.msra.mxu0 %v911
    %1003 = vmatprep.subr.bf16.mxu0 %v914
    %1004 = vmatpush1.bf16.msra.mxu0 %v913
    %1005 = vmatprep.subr.bf16.mxu0 %v916
    %1006 = vmatpush1.bf16.msra.mxu0 %v915
    %1007 = vmatprep.subr.bf16.mxu0 %v918
    %1008 = vmatpush1.bf16.msra.mxu0 %v917
    %1009 = vmatprep.subr.bf16.mxu0 %v920
    %1010 = vmatpush1.bf16.msra.mxu0 %v919
    %1011 = vmatprep.subr.bf16.mxu0 %v922
    %1012 = vmatpush1.bf16.msra.mxu0 %v921
    %1013 = vmatprep.subr.bf16.mxu0 %v924
    %1014 = vmatpush1.bf16.msra.mxu0 %v923
    %1015 = vmatprep.subr.bf16.mxu0 %v926
    %1016 = vmatpush1.bf16.msra.mxu0 %v925
    %1017 = vmatprep.subr.bf16.mxu0 %v928
    %1018 = vmatpush1.bf16.msra.mxu0 %v927
    %1019 = vmatprep.subr.bf16.mxu0 %v930
    %1020 = vmatpush1.bf16.msra.mxu0 %v929
    %1021 = vmatprep.subr.bf16.mxu0 %v932
    %1022 = vmatpush1.bf16.msra.mxu0 %v931
    %1023 = vmatprep.subr.bf16.mxu0 %v934
    %1024 = vmatpush1.bf16.msra.mxu0 %v933
    %1025 = vmatprep.subr.bf16.mxu0 %v936
    %1026 = vmatpush1.bf16.msra.mxu0 %v935
    %1027 = vmatprep.mubr.bf16.mxu0 %v940
    %1028 = vmatmul.mubr.bf16.gmra.mrb[0].mxu0 %v939
    %v1029 = vpop.f32.mrb[0].mxu0
    %v1030 = vadd.f32 %v989, %v1029
    %v1031 = vpop.f32.mrb[0].mxu0
    %v1032 = vadd.f32 %v991, %v1031
    %v1033 = vpop.f32.mrb[0].mxu0
    %v1034 = vpop.f32.mrb[0].mxu0
    %1035 = vdwg.mxu0
    %vm1036 = vcmp.gt.f32.partialorder %v1030, 0.0
    %vm1037 = vcmp.gt.f32.partialorder %v1032, 0.0
    %v1038 = vmul.f32 %v1030, 0.01
    %v1039 = vmul.f32 %v1032, 0.01
    %v1040 = vsel %vm1036, %v1030, %v1038
    %v1041 = vsel %vm1037, %v1032, %v1039
    %v1042 = vld [vmem:[#allocation2 + $0x500] sm:$0xff]
    %v1043 = vld [vmem:[#allocation2 + $0x508] sm:$0xff]
    %v1044 = vld [vmem:[#allocation2 + $0x510] sm:$0xff]
    %v1045 = vld [vmem:[#allocation2 + $0x518] sm:$0xff]
    %v1046 = vld [vmem:[#allocation2 + $0x520] sm:$0xff]
    %v1047 = vld [vmem:[#allocation2 + $0x528] sm:$0xff]
    %v1048 = vld [vmem:[#allocation2 + $0x530] sm:$0xff]
    %v1049 = vld [vmem:[#allocation2 + $0x538] sm:$0xff]
    %v1050 = vld [vmem:[#allocation2 + $0x540] sm:$0xff]
    %v1051 = vld [vmem:[#allocation2 + $0x548] sm:$0xff]
    %v1052 = vld [vmem:[#allocation2 + $0x550] sm:$0xff]
    %v1053 = vld [vmem:[#allocation2 + $0x558] sm:$0xff]
    %v1054 = vld [vmem:[#allocation2 + $0x560] sm:$0xff]
    %v1055 = vld [vmem:[#allocation2 + $0x568] sm:$0xff]
    %v1056 = vld [vmem:[#allocation2 + $0x570] sm:$0xff]
    %v1057 = vld [vmem:[#allocation2 + $0x578] sm:$0xff]
    %v1058 = vld [vmem:[#allocation2 + $0x580] sm:$0xff]
    %v1059 = vld [vmem:[#allocation2 + $0x588] sm:$0xff]
    %v1060 = vld [vmem:[#allocation2 + $0x590] sm:$0xff]
    %v1061 = vld [vmem:[#allocation2 + $0x598] sm:$0xff]
    %v1062 = vld [vmem:[#allocation2 + $0x5a0] sm:$0xff]
    %v1063 = vld [vmem:[#allocation2 + $0x5a8] sm:$0xff]
    %v1064 = vld [vmem:[#allocation2 + $0x5b0] sm:$0xff]
    %v1065 = vld [vmem:[#allocation2 + $0x5b8] sm:$0xff]
    %v1066 = vld [vmem:[#allocation2 + $0x5c0] sm:$0xff]
    %v1067 = vld [vmem:[#allocation2 + $0x5c8] sm:$0xff]
    %v1068 = vld [vmem:[#allocation2 + $0x5d0] sm:$0xff]
    %v1069 = vld [vmem:[#allocation2 + $0x5d8] sm:$0xff]
    %v1070 = vld [vmem:[#allocation2 + $0x5e0] sm:$0xff]
    %v1071 = vld [vmem:[#allocation2 + $0x5e8] sm:$0xff]
    %v1072 = vld [vmem:[#allocation2 + $0x5f0] sm:$0xff]
    %v1073 = vld [vmem:[#allocation2 + $0x5f8] sm:$0xff]
    %v1074 = vpack.c.bf16 %v1040, %v1040
    %v1075 = vpack.c.bf16 %v1041, %v1041
    %s1076 = scalar_lea.vmem [#allocation10], 7
    %v1077 = vld [vmem:[%s1076] ss:$8 sm:$0x3]
    %v1079 = vlaneseq
    %v1080 = vshrl.u32 %v1079, 7
    %v1081 = vsub.s32 0, %v1080
    %v1082 = vrot.slane %v1077, %v1081
    %v1083 = vlaneseq
    %v1084 = vshrl.u32 %v1083, 7
    %v1085 = vsub.s32 1, %v1084
    %v1086 = vrot.slane %v1077, %v1085
    %1089 = vmatprep.subr.bf16.mxu0 %v1043
    %1090 = vmatpush1.bf16.msra.mxu0 %v1042
    %1091 = vmatprep.subr.bf16.mxu0 %v1045
    %1092 = vmatpush1.bf16.msra.mxu0 %v1044
    %1093 = vmatprep.subr.bf16.mxu0 %v1047
    %1094 = vmatpush1.bf16.msra.mxu0 %v1046
    %1095 = vmatprep.subr.bf16.mxu0 %v1049
    %1096 = vmatpush1.bf16.msra.mxu0 %v1048
    %1097 = vmatprep.subr.bf16.mxu0 %v1051
    %1098 = vmatpush1.bf16.msra.mxu0 %v1050
    %1099 = vmatprep.subr.bf16.mxu0 %v1053
    %1100 = vmatpush1.bf16.msra.mxu0 %v1052
    %1101 = vmatprep.subr.bf16.mxu0 %v1055
    %1102 = vmatpush1.bf16.msra.mxu0 %v1054
    %1103 = vmatprep.subr.bf16.mxu0 %v1057
    %1104 = vmatpush1.bf16.msra.mxu0 %v1056
    %1105 = vmatprep.subr.bf16.mxu0 %v1059
    %1106 = vmatpush1.bf16.msra.mxu0 %v1058
    %1107 = vmatprep.subr.bf16.mxu0 %v1061
    %1108 = vmatpush1.bf16.msra.mxu0 %v1060
    %1109 = vmatprep.subr.bf16.mxu0 %v1063
    %1110 = vmatpush1.bf16.msra.mxu0 %v1062
    %1111 = vmatprep.subr.bf16.mxu0 %v1065
    %1112 = vmatpush1.bf16.msra.mxu0 %v1064
    %1113 = vmatprep.subr.bf16.mxu0 %v1067
    %1114 = vmatpush1.bf16.msra.mxu0 %v1066
    %1115 = vmatprep.subr.bf16.mxu0 %v1069
    %1116 = vmatpush1.bf16.msra.mxu0 %v1068
    %1117 = vmatprep.subr.bf16.mxu0 %v1071
    %1118 = vmatpush1.bf16.msra.mxu0 %v1070
    %1119 = vmatprep.subr.bf16.mxu0 %v1073
    %1120 = vmatpush1.bf16.msra.mxu0 %v1072
    %1121 = vmatprep.mubr.bf16.mxu0 %v1075
    %1122 = vmatmul.mubr.bf16.gmra.mrb[0].mxu0 %v1074
    %v1123 = vpop.f32.mrb[0].mxu0
    %v1124 = vadd.f32 %v1082, %v1123
    %v1125 = vpop.f32.mrb[0].mxu0
    %v1126 = vadd.f32 %v1086, %v1125
    %v1127 = vpop.f32.mrb[0].mxu0
    %v1128 = vpop.f32.mrb[0].mxu0
    %1129 = vdwg.mxu0
    %v1130 = vld [vmem:[#allocation7 + $0xa0] sm:$0xff]
    %v1131 = vld [vmem:[#allocation7 + $0xa8] sm:$0xff]
    %v1132 = vld [vmem:[#allocation7 + $0xb0] sm:$0xff]
    %v1133 = vld [vmem:[#allocation7 + $0xb8] sm:$0xff]
    %v1134 = vld [vmem:[#allocation7 + $0xc0] sm:$0xff]
    %v1135 = vld [vmem:[#allocation7 + $0xc8] sm:$0xff]
    %v1136 = vld [vmem:[#allocation7 + $0xd0] sm:$0xff]
    %v1137 = vld [vmem:[#allocation7 + $0xd8] sm:$0xff]
    %v1138 = vld [vmem:[#allocation7 + $0xe0] sm:$0xff]
    %v1139 = vld [vmem:[#allocation7 + $0xe8] sm:$0xff]
    %v1140 = vld [vmem:[#allocation7 + $0xf0] sm:$0xff]
    %v1141 = vld [vmem:[#allocation7 + $0xf8] sm:$0xff]
    %v1142 = vld [vmem:[#allocation7 + $0x100] sm:$0xff]
    %v1143 = vld [vmem:[#allocation7 + $0x108] sm:$0xff]
    %v1144 = vld [vmem:[#allocation7 + $0x110] sm:$0xff]
    %v1145 = vld [vmem:[#allocation7 + $0x118] sm:$0xff]
    %v1146 = vld [vmem:[#allocation7 + $0x120] sm:$0xff]
    %v1147 = vld [vmem:[#allocation7 + $0x128] sm:$0xff]
    %v1148 = vld [vmem:[#allocation7 + $0x130] sm:$0xff]
    %v1149 = vld [vmem:[#allocation7 + $0x138] sm:$0xff]
    %v1150 = vld [vmem:[#allocation7 + $0x140] sm:$0xff]
    %v1151 = vld [vmem:[#allocation7 + $0x148] sm:$0xff]
    %v1152 = vld [vmem:[#allocation7 + $0x150] sm:$0xff]
    %v1153 = vld [vmem:[#allocation7 + $0x158] sm:$0xff]
    %v1154 = vld [vmem:[#allocation7 + $0x160] sm:$0xff]
    %v1155 = vld [vmem:[#allocation7 + $0x168] sm:$0xff]
    %v1156 = vld [vmem:[#allocation7 + $0x170] sm:$0xff]
    %v1157 = vld [vmem:[#allocation7 + $0x178] sm:$0xff]
    %v1158 = vld [vmem:[#allocation7 + $0x180] sm:$0xff]
    %v1159 = vld [vmem:[#allocation7 + $0x188] sm:$0xff]
    %v1160 = vld [vmem:[#allocation7 + $0x190] sm:$0xff]
    %v1161 = vld [vmem:[#allocation7 + $0x198] sm:$0xff]
    %v1162 = vld [vmem:[#allocation7 + $0x1a0] sm:$0xff]
    %v1163 = vld [vmem:[#allocation7 + $0x1a8] sm:$0xff]
    %v1164 = vld [vmem:[#allocation7 + $0x1b0] sm:$0xff]
    %v1165 = vld [vmem:[#allocation7 + $0x1b8] sm:$0xff]
    %v1166 = vld [vmem:[#allocation7 + $0x1c0] sm:$0xff]
    %v1167 = vld [vmem:[#allocation7 + $0x1c8] sm:$0xff]
    %v1168 = vld [vmem:[#allocation7 + $0x1d0] sm:$0xff]
    %v1169 = vld [vmem:[#allocation7 + $0x1d8] sm:$0xff]
    %v1170 = vld [vmem:[#allocation7 + $0x1e0] sm:$0xff]
    %v1171 = vld [vmem:[#allocation7 + $0x1e8] sm:$0xff]
    %v1172 = vld [vmem:[#allocation7 + $0x1f0] sm:$0xff]
    %v1173 = vld [vmem:[#allocation7 + $0x1f8] sm:$0xff]
    %v1174 = vld [vmem:[#allocation7 + $0x200] sm:$0xff]
    %v1175 = vld [vmem:[#allocation7 + $0x208] sm:$0xff]
    %v1176 = vld [vmem:[#allocation7 + $0x210] sm:$0xff]
    %v1177 = vld [vmem:[#allocation7 + $0x218] sm:$0xff]
    %v1178 = vld [vmem:[#allocation7 + $0x220] sm:$0xff]
    %v1179 = vld [vmem:[#allocation7 + $0x228] sm:$0xff]
    %v1180 = vld [vmem:[#allocation7 + $0x230] sm:$0xff]
    %v1181 = vld [vmem:[#allocation7 + $0x238] sm:$0xff]
    %v1182 = vld [vmem:[#allocation7 + $0x240] sm:$0xff]
    %v1183 = vld [vmem:[#allocation7 + $0x248] sm:$0xff]
    %v1184 = vld [vmem:[#allocation7 + $0x250] sm:$0xff]
    %v1185 = vld [vmem:[#allocation7 + $0x258] sm:$0xff]
    %v1186 = vld [vmem:[#allocation7 + $0x260] sm:$0xff]
    %v1187 = vld [vmem:[#allocation7 + $0x268] sm:$0xff]
    %v1188 = vld [vmem:[#allocation7 + $0x270] sm:$0xff]
    %v1189 = vld [vmem:[#allocation7 + $0x278] sm:$0xff]
    %v1190 = vld [vmem:[#allocation7 + $0x280] sm:$0xff]
    %v1191 = vld [vmem:[#allocation7 + $0x288] sm:$0xff]
    %v1192 = vld [vmem:[#allocation7 + $0x290] sm:$0xff]
    %v1193 = vld [vmem:[#allocation7 + $0x298] sm:$0xff]
    %v1194 = vpack.c.bf16 %v867, %v867
    %v1195 = vpack.c.bf16 %v869, %v869
    %v1196 = vld [vmem:[#allocation7 + $0x2a0] sm:$0xff]
    %v1197 = vld [vmem:[#allocation7 + $0x2a8] sm:$0xff]
    %v1198 = vld [vmem:[#allocation7 + $0x2b0] sm:$0xff]
    %v1199 = vld [vmem:[#allocation7 + $0x2b8] sm:$0xff]
    %v1200 = vld [vmem:[#allocation7 + $0x2c0] sm:$0xff]
    %v1201 = vld [vmem:[#allocation7 + $0x2c8] sm:$0xff]
    %v1202 = vld [vmem:[#allocation7 + $0x2d0] sm:$0xff]
    %v1203 = vld [vmem:[#allocation7 + $0x2d8] sm:$0xff]
    %v1204 = vld [vmem:[#allocation7 + $0x2e0] sm:$0xff]
    %v1205 = vld [vmem:[#allocation7 + $0x2e8] sm:$0xff]
    %v1206 = vld [vmem:[#allocation7 + $0x2f0] sm:$0xff]
    %v1207 = vld [vmem:[#allocation7 + $0x2f8] sm:$0xff]
    %v1208 = vld [vmem:[#allocation7 + $0x300] sm:$0xff]
    %v1209 = vld [vmem:[#allocation7 + $0x308] sm:$0xff]
    %v1210 = vld [vmem:[#allocation7 + $0x310] sm:$0xff]
    %v1211 = vld [vmem:[#allocation7 + $0x318] sm:$0xff]
    %v1212 = vld [vmem:[#allocation7 + $0x320] sm:$0xff]
    %v1213 = vld [vmem:[#allocation7 + $0x328] sm:$0xff]
    %v1214 = vld [vmem:[#allocation7 + $0x330] sm:$0xff]
    %v1215 = vld [vmem:[#allocation7 + $0x338] sm:$0xff]
    %v1216 = vld [vmem:[#allocation7 + $0x340] sm:$0xff]
    %v1217 = vld [vmem:[#allocation7 + $0x348] sm:$0xff]
    %v1218 = vld [vmem:[#allocation7 + $0x350] sm:$0xff]
    %v1219 = vld [vmem:[#allocation7 + $0x358] sm:$0xff]
    %v1220 = vld [vmem:[#allocation7 + $0x360] sm:$0xff]
    %v1221 = vld [vmem:[#allocation7 + $0x368] sm:$0xff]
    %v1222 = vld [vmem:[#allocation7 + $0x370] sm:$0xff]
    %v1223 = vld [vmem:[#allocation7 + $0x378] sm:$0xff]
    %v1224 = vld [vmem:[#allocation7 + $0x380] sm:$0xff]
    %v1225 = vld [vmem:[#allocation7 + $0x388] sm:$0xff]
    %v1226 = vld [vmem:[#allocation7 + $0x390] sm:$0xff]
    %v1227 = vld [vmem:[#allocation7 + $0x398] sm:$0xff]
    %v1228 = vld [vmem:[#allocation7 + $0x3a0] sm:$0xff]
    %v1229 = vld [vmem:[#allocation7 + $0x3a8] sm:$0xff]
    %v1230 = vld [vmem:[#allocation7 + $0x3b0] sm:$0xff]
    %v1231 = vld [vmem:[#allocation7 + $0x3b8] sm:$0xff]
    %v1232 = vld [vmem:[#allocation7 + $0x3c0] sm:$0xff]
    %v1233 = vld [vmem:[#allocation7 + $0x3c8] sm:$0xff]
    %v1234 = vld [vmem:[#allocation7 + $0x3d0] sm:$0xff]
    %v1235 = vld [vmem:[#allocation7 + $0x3d8] sm:$0xff]
    %v1236 = vld [vmem:[#allocation7 + $0x3e0] sm:$0xff]
    %v1237 = vld [vmem:[#allocation7 + $0x3e8] sm:$0xff]
    %v1238 = vld [vmem:[#allocation7 + $0x3f0] sm:$0xff]
    %v1239 = vld [vmem:[#allocation7 + $0x3f8] sm:$0xff]
    %v1240 = vld [vmem:[#allocation7 + $0x400] sm:$0xff]
    %v1241 = vld [vmem:[#allocation7 + $0x408] sm:$0xff]
    %v1242 = vld [vmem:[#allocation7 + $0x410] sm:$0xff]
    %v1243 = vld [vmem:[#allocation7 + $0x418] sm:$0xff]
    %v1244 = vld [vmem:[#allocation7 + $0x420] sm:$0xff]
    %v1245 = vld [vmem:[#allocation7 + $0x428] sm:$0xff]
    %v1246 = vld [vmem:[#allocation7 + $0x430] sm:$0xff]
    %v1247 = vld [vmem:[#allocation7 + $0x438] sm:$0xff]
    %v1248 = vld [vmem:[#allocation7 + $0x440] sm:$0xff]
    %v1249 = vld [vmem:[#allocation7 + $0x448] sm:$0xff]
    %v1250 = vld [vmem:[#allocation7 + $0x450] sm:$0xff]
    %v1251 = vld [vmem:[#allocation7 + $0x458] sm:$0xff]
    %v1252 = vld [vmem:[#allocation7 + $0x460] sm:$0xff]
    %v1253 = vld [vmem:[#allocation7 + $0x468] sm:$0xff]
    %v1254 = vld [vmem:[#allocation7 + $0x470] sm:$0xff]
    %v1255 = vld [vmem:[#allocation7 + $0x478] sm:$0xff]
    %v1256 = vld [vmem:[#allocation7 + $0x480] sm:$0xff]
    %v1257 = vld [vmem:[#allocation7 + $0x488] sm:$0xff]
    %v1258 = vld [vmem:[#allocation7 + $0x490] sm:$0xff]
    %v1259 = vld [vmem:[#allocation7 + $0x498] sm:$0xff]
    %v1260 = vpack.c.bf16 %v1124, %v1124
    %v1261 = vpack.c.bf16 %v1126, %v1126
    %v1326 = vunpack.c.l.b16 %v1196
    %v1327 = vunpack.c.h.b16 %v1196
    %v1328 = vunpack.c.l.b16 %v1197
    %v1329 = vunpack.c.h.b16 %v1197
    %v1330 = vunpack.c.l.b16 %v1198
    %v1331 = vunpack.c.h.b16 %v1198
    %v1332 = vunpack.c.l.b16 %v1199
    %v1333 = vunpack.c.h.b16 %v1199
    %v1334 = vunpack.c.l.b16 %v1200
    %v1335 = vunpack.c.h.b16 %v1200
    %v1336 = vunpack.c.l.b16 %v1201
    %v1337 = vunpack.c.h.b16 %v1201
    %v1338 = vunpack.c.l.b16 %v1202
    %v1339 = vunpack.c.h.b16 %v1202
    %v1340 = vunpack.c.l.b16 %v1203
    %v1341 = vunpack.c.h.b16 %v1203
    %v1342 = vunpack.c.l.b16 %v1204
    %v1343 = vunpack.c.h.b16 %v1204
    %v1344 = vunpack.c.l.b16 %v1205
    %v1345 = vunpack.c.h.b16 %v1205
    %v1346 = vunpack.c.l.b16 %v1206
    %v1347 = vunpack.c.h.b16 %v1206
    %v1348 = vunpack.c.l.b16 %v1207
    %v1349 = vunpack.c.h.b16 %v1207
    %v1350 = vunpack.c.l.b16 %v1208
    %v1351 = vunpack.c.h.b16 %v1208
    %v1352 = vunpack.c.l.b16 %v1209
    %v1353 = vunpack.c.h.b16 %v1209
    %v1354 = vunpack.c.l.b16 %v1210
    %v1355 = vunpack.c.h.b16 %v1210
    %v1356 = vunpack.c.l.b16 %v1211
    %v1357 = vunpack.c.h.b16 %v1211
    %v1358 = vunpack.c.l.b16 %v1212
    %v1359 = vunpack.c.h.b16 %v1212
    %v1360 = vunpack.c.l.b16 %v1213
    %v1361 = vunpack.c.h.b16 %v1213
    %v1362 = vunpack.c.l.b16 %v1214
    %v1363 = vunpack.c.h.b16 %v1214
    %v1364 = vunpack.c.l.b16 %v1215
    %v1365 = vunpack.c.h.b16 %v1215
    %v1366 = vunpack.c.l.b16 %v1216
    %v1367 = vunpack.c.h.b16 %v1216
    %v1368 = vunpack.c.l.b16 %v1217
    %v1369 = vunpack.c.h.b16 %v1217
    %v1370 = vunpack.c.l.b16 %v1218
    %v1371 = vunpack.c.h.b16 %v1218
    %v1372 = vunpack.c.l.b16 %v1219
    %v1373 = vunpack.c.h.b16 %v1219
    %v1374 = vunpack.c.l.b16 %v1220
    %v1375 = vunpack.c.h.b16 %v1220
    %v1376 = vunpack.c.l.b16 %v1221
    %v1377 = vunpack.c.h.b16 %v1221
    %v1378 = vunpack.c.l.b16 %v1222
    %v1379 = vunpack.c.h.b16 %v1222
    %v1380 = vunpack.c.l.b16 %v1223
    %v1381 = vunpack.c.h.b16 %v1223
    %v1382 = vunpack.c.l.b16 %v1224
    %v1383 = vunpack.c.h.b16 %v1224
    %v1384 = vunpack.c.l.b16 %v1225
    %v1385 = vunpack.c.h.b16 %v1225
    %v1386 = vunpack.c.l.b16 %v1226
    %v1387 = vunpack.c.h.b16 %v1226
    %v1388 = vunpack.c.l.b16 %v1227
    %v1389 = vunpack.c.h.b16 %v1227
    %v1390 = vunpack.c.l.b16 %v1228
    %v1391 = vunpack.c.h.b16 %v1228
    %v1392 = vunpack.c.l.b16 %v1229
    %v1393 = vunpack.c.h.b16 %v1229
    %v1394 = vunpack.c.l.b16 %v1230
    %v1395 = vunpack.c.h.b16 %v1230
    %v1396 = vunpack.c.l.b16 %v1231
    %v1397 = vunpack.c.h.b16 %v1231
    %v1398 = vunpack.c.l.b16 %v1232
    %v1399 = vunpack.c.h.b16 %v1232
    %v1400 = vunpack.c.l.b16 %v1233
    %v1401 = vunpack.c.h.b16 %v1233
    %v1402 = vunpack.c.l.b16 %v1234
    %v1403 = vunpack.c.h.b16 %v1234
    %v1404 = vunpack.c.l.b16 %v1235
    %v1405 = vunpack.c.h.b16 %v1235
    %v1406 = vunpack.c.l.b16 %v1236
    %v1407 = vunpack.c.h.b16 %v1236
    %v1408 = vunpack.c.l.b16 %v1237
    %v1409 = vunpack.c.h.b16 %v1237
    %v1410 = vunpack.c.l.b16 %v1238
    %v1411 = vunpack.c.h.b16 %v1238
    %v1412 = vunpack.c.l.b16 %v1239
    %v1413 = vunpack.c.h.b16 %v1239
    %v1414 = vunpack.c.l.b16 %v1240
    %v1415 = vunpack.c.h.b16 %v1240
    %v1416 = vunpack.c.l.b16 %v1241
    %v1417 = vunpack.c.h.b16 %v1241
    %v1418 = vunpack.c.l.b16 %v1242
    %v1419 = vunpack.c.h.b16 %v1242
    %v1420 = vunpack.c.l.b16 %v1243
    %v1421 = vunpack.c.h.b16 %v1243
    %v1422 = vunpack.c.l.b16 %v1244
    %v1423 = vunpack.c.h.b16 %v1244
    %v1424 = vunpack.c.l.b16 %v1245
    %v1425 = vunpack.c.h.b16 %v1245
    %v1426 = vunpack.c.l.b16 %v1246
    %v1427 = vunpack.c.h.b16 %v1246
    %v1428 = vunpack.c.l.b16 %v1247
    %v1429 = vunpack.c.h.b16 %v1247
    %v1430 = vunpack.c.l.b16 %v1248
    %v1431 = vunpack.c.h.b16 %v1248
    %v1432 = vunpack.c.l.b16 %v1249
    %v1433 = vunpack.c.h.b16 %v1249
    %v1434 = vunpack.c.l.b16 %v1250
    %v1435 = vunpack.c.h.b16 %v1250
    %v1436 = vunpack.c.l.b16 %v1251
    %v1437 = vunpack.c.h.b16 %v1251
    %v1438 = vunpack.c.l.b16 %v1252
    %v1439 = vunpack.c.h.b16 %v1252
    %v1440 = vunpack.c.l.b16 %v1253
    %v1441 = vunpack.c.h.b16 %v1253
    %v1442 = vunpack.c.l.b16 %v1254
    %v1443 = vunpack.c.h.b16 %v1254
    %v1444 = vunpack.c.l.b16 %v1255
    %v1445 = vunpack.c.h.b16 %v1255
    %v1446 = vunpack.c.l.b16 %v1256
    %v1447 = vunpack.c.h.b16 %v1256
    %v1448 = vunpack.c.l.b16 %v1257
    %v1449 = vunpack.c.h.b16 %v1257
    %v1450 = vunpack.c.l.b16 %v1258
    %v1451 = vunpack.c.h.b16 %v1258
    %v1452 = vunpack.c.l.b16 %v1259
    %v1453 = vunpack.c.h.b16 %v1259
    %v1454 = vpack.c.b16 %v1330, %v1326
    %v1455 = vpack.c.b16 %v1331, %v1327
    %v1456 = vpack.c.b16 %v1332, %v1328
    %v1457 = vpack.c.b16 %v1333, %v1329
    %v1458 = vpack.c.b16 %v1338, %v1334
    %v1459 = vpack.c.b16 %v1339, %v1335
    %v1460 = vpack.c.b16 %v1340, %v1336
    %v1461 = vpack.c.b16 %v1341, %v1337
    %v1462 = vpack.c.b16 %v1346, %v1342
    %v1463 = vpack.c.b16 %v1347, %v1343
    %v1464 = vpack.c.b16 %v1348, %v1344
    %v1465 = vpack.c.b16 %v1349, %v1345
    %v1466 = vpack.c.b16 %v1354, %v1350
    %v1467 = vpack.c.b16 %v1355, %v1351
    %v1468 = vpack.c.b16 %v1356, %v1352
    %v1469 = vpack.c.b16 %v1357, %v1353
    %v1470 = vpack.c.b16 %v1362, %v1358
    %v1471 = vpack.c.b16 %v1363, %v1359
    %v1472 = vpack.c.b16 %v1364, %v1360
    %v1473 = vpack.c.b16 %v1365, %v1361
    %v1474 = vpack.c.b16 %v1370, %v1366
    %v1475 = vpack.c.b16 %v1371, %v1367
    %v1476 = vpack.c.b16 %v1372, %v1368
    %v1477 = vpack.c.b16 %v1373, %v1369
    %v1478 = vpack.c.b16 %v1378, %v1374
    %v1479 = vpack.c.b16 %v1379, %v1375
    %v1480 = vpack.c.b16 %v1380, %v1376
    %v1481 = vpack.c.b16 %v1381, %v1377
    %v1482 = vpack.c.b16 %v1386, %v1382
    %v1483 = vpack.c.b16 %v1387, %v1383
    %v1484 = vpack.c.b16 %v1388, %v1384
    %v1485 = vpack.c.b16 %v1389, %v1385
    %v1486 = vpack.c.b16 %v1394, %v1390
    %v1487 = vpack.c.b16 %v1395, %v1391
    %v1488 = vpack.c.b16 %v1396, %v1392
    %v1489 = vpack.c.b16 %v1397, %v1393
    %v1490 = vpack.c.b16 %v1402, %v1398
    %v1491 = vpack.c.b16 %v1403, %v1399
    %v1492 = vpack.c.b16 %v1404, %v1400
    %v1493 = vpack.c.b16 %v1405, %v1401
    %v1494 = vpack.c.b16 %v1410, %v1406
    %v1495 = vpack.c.b16 %v1411, %v1407
    %v1496 = vpack.c.b16 %v1412, %v1408
    %v1497 = vpack.c.b16 %v1413, %v1409
    %v1498 = vpack.c.b16 %v1418, %v1414
    %v1499 = vpack.c.b16 %v1419, %v1415
    %v1500 = vpack.c.b16 %v1420, %v1416
    %v1501 = vpack.c.b16 %v1421, %v1417
    %v1502 = vpack.c.b16 %v1426, %v1422
    %v1503 = vpack.c.b16 %v1427, %v1423
    %v1504 = vpack.c.b16 %v1428, %v1424
    %v1505 = vpack.c.b16 %v1429, %v1425
    %v1506 = vpack.c.b16 %v1434, %v1430
    %v1507 = vpack.c.b16 %v1435, %v1431
    %v1508 = vpack.c.b16 %v1436, %v1432
    %v1509 = vpack.c.b16 %v1437, %v1433
    %v1510 = vpack.c.b16 %v1442, %v1438
    %v1511 = vpack.c.b16 %v1443, %v1439
    %v1512 = vpack.c.b16 %v1444, %v1440
    %v1513 = vpack.c.b16 %v1445, %v1441
    %v1514 = vpack.c.b16 %v1450, %v1446
    %v1515 = vpack.c.b16 %v1451, %v1447
    %v1516 = vpack.c.b16 %v1452, %v1448
    %v1517 = vpack.c.b16 %v1453, %v1449
    %1582 = vmatprep.subr.bf16.mxu0 %v1455
    %1583 = vmatpush1.bf16.msra.mxu0 %v1454
    %1584 = vmatprep.subr.bf16.mxu0 %v1459
    %1585 = vmatpush1.bf16.msra.mxu0 %v1458
    %1586 = vmatprep.subr.bf16.mxu0 %v1463
    %1587 = vmatpush1.bf16.msra.mxu0 %v1462
    %1588 = vmatprep.subr.bf16.mxu0 %v1467
    %1589 = vmatpush1.bf16.msra.mxu0 %v1466
    %1590 = vmatprep.subr.bf16.mxu0 %v1471
    %1591 = vmatpush1.bf16.msra.mxu0 %v1470
    %1592 = vmatprep.subr.bf16.mxu0 %v1475
    %1593 = vmatpush1.bf16.msra.mxu0 %v1474
    %1594 = vmatprep.subr.bf16.mxu0 %v1479
    %1595 = vmatpush1.bf16.msra.mxu0 %v1478
    %1596 = vmatprep.subr.bf16.mxu0 %v1483
    %1597 = vmatpush1.bf16.msra.mxu0 %v1482
    %1598 = vmatprep.subr.bf16.mxu0 %v1487
    %1599 = vmatpush1.bf16.msra.mxu0 %v1486
    %1600 = vmatprep.subr.bf16.mxu0 %v1491
    %1601 = vmatpush1.bf16.msra.mxu0 %v1490
    %1602 = vmatprep.subr.bf16.mxu0 %v1495
    %1603 = vmatpush1.bf16.msra.mxu0 %v1494
    %1604 = vmatprep.subr.bf16.mxu0 %v1499
    %1605 = vmatpush1.bf16.msra.mxu0 %v1498
    %1606 = vmatprep.subr.bf16.mxu0 %v1503
    %1607 = vmatpush1.bf16.msra.mxu0 %v1502
    %1608 = vmatprep.subr.bf16.mxu0 %v1507
    %1609 = vmatpush1.bf16.msra.mxu0 %v1506
    %1610 = vmatprep.subr.bf16.mxu0 %v1511
    %1611 = vmatpush1.bf16.msra.mxu0 %v1510
    %1612 = vmatprep.subr.bf16.mxu0 %v1515
    %1613 = vmatpush1.bf16.msra.mxu0 %v1514
    %1614 = vmatprep.mubr.bf16.mxu0 %v1261
    %1615 = vmatmul.mubr.bf16.gmra.mrb[0].mxu0 %v1260
    %v1616 = vpop.f32.mrb[0].mxu0
    %v1617 = vadd.f32 0.0, %v1616
    %v1618 = vpop.f32.mrb[0].mxu0
    %v1619 = vadd.f32 0.0, %v1618
    %v1620 = vpop.f32.mrb[0].mxu0
    %v1621 = vpop.f32.mrb[0].mxu0
    %1622 = vdwg.mxu0
    %1623 = vmatprep.subr.bf16.mxu0 %v1457
    %1624 = vmatpush1.bf16.msra.mxu0 %v1456
    %1625 = vmatprep.subr.bf16.mxu0 %v1461
    %1626 = vmatpush1.bf16.msra.mxu0 %v1460
    %1627 = vmatprep.subr.bf16.mxu0 %v1465
    %1628 = vmatpush1.bf16.msra.mxu0 %v1464
    %1629 = vmatprep.subr.bf16.mxu0 %v1469
    %1630 = vmatpush1.bf16.msra.mxu0 %v1468
    %1631 = vmatprep.subr.bf16.mxu0 %v1473
    %1632 = vmatpush1.bf16.msra.mxu0 %v1472
    %1633 = vmatprep.subr.bf16.mxu0 %v1477
    %1634 = vmatpush1.bf16.msra.mxu0 %v1476
    %1635 = vmatprep.subr.bf16.mxu0 %v1481
    %1636 = vmatpush1.bf16.msra.mxu0 %v1480
    %1637 = vmatprep.subr.bf16.mxu0 %v1485
    %1638 = vmatpush1.bf16.msra.mxu0 %v1484
    %1639 = vmatprep.subr.bf16.mxu0 %v1489
    %1640 = vmatpush1.bf16.msra.mxu0 %v1488
    %1641 = vmatprep.subr.bf16.mxu0 %v1493
    %1642 = vmatpush1.bf16.msra.mxu0 %v1492
    %1643 = vmatprep.subr.bf16.mxu0 %v1497
    %1644 = vmatpush1.bf16.msra.mxu0 %v1496
    %1645 = vmatprep.subr.bf16.mxu0 %v1501
    %1646 = vmatpush1.bf16.msra.mxu0 %v1500
    %1647 = vmatprep.subr.bf16.mxu0 %v1505
    %1648 = vmatpush1.bf16.msra.mxu0 %v1504
    %1649 = vmatprep.subr.bf16.mxu0 %v1509
    %1650 = vmatpush1.bf16.msra.mxu0 %v1508
    %1651 = vmatprep.subr.bf16.mxu0 %v1513
    %1652 = vmatpush1.bf16.msra.mxu0 %v1512
    %1653 = vmatprep.subr.bf16.mxu0 %v1517
    %1654 = vmatpush1.bf16.msra.mxu0 %v1516
    %1655 = vmatprep.mubr.bf16.mxu0 %v1261
    %1656 = vmatmul.mubr.bf16.gmra.mrb[0].mxu0 %v1260
    %v1657 = vpop.f32.mrb[0].mxu0
    %v1658 = vadd.f32 0.0, %v1657
    %v1659 = vpop.f32.mrb[0].mxu0
    %v1660 = vadd.f32 0.0, %v1659
    %v1661 = vpop.f32.mrb[0].mxu0
    %v1662 = vpop.f32.mrb[0].mxu0
    %1663 = vdwg.mxu0
    %v1728 = vunpack.c.l.b16 %v1130
    %v1729 = vunpack.c.h.b16 %v1130
    %v1730 = vunpack.c.l.b16 %v1131
    %v1731 = vunpack.c.h.b16 %v1131
    %v1732 = vunpack.c.l.b16 %v1132
    %v1733 = vunpack.c.h.b16 %v1132
    %v1734 = vunpack.c.l.b16 %v1133
    %v1735 = vunpack.c.h.b16 %v1133
    %v1736 = vunpack.c.l.b16 %v1134
    %v1737 = vunpack.c.h.b16 %v1134
    %v1738 = vunpack.c.l.b16 %v1135
    %v1739 = vunpack.c.h.b16 %v1135
    %v1740 = vunpack.c.l.b16 %v1136
    %v1741 = vunpack.c.h.b16 %v1136
    %v1742 = vunpack.c.l.b16 %v1137
    %v1743 = vunpack.c.h.b16 %v1137
    %v1744 = vunpack.c.l.b16 %v1138
    %v1745 = vunpack.c.h.b16 %v1138
    %v1746 = vunpack.c.l.b16 %v1139
    %v1747 = vunpack.c.h.b16 %v1139
    %v1748 = vunpack.c.l.b16 %v1140
    %v1749 = vunpack.c.h.b16 %v1140
    %v1750 = vunpack.c.l.b16 %v1141
    %v1751 = vunpack.c.h.b16 %v1141
    %v1752 = vunpack.c.l.b16 %v1142
    %v1753 = vunpack.c.h.b16 %v1142
    %v1754 = vunpack.c.l.b16 %v1143
    %v1755 = vunpack.c.h.b16 %v1143
    %v1756 = vunpack.c.l.b16 %v1144
    %v1757 = vunpack.c.h.b16 %v1144
    %v1758 = vunpack.c.l.b16 %v1145
    %v1759 = vunpack.c.h.b16 %v1145
    %v1760 = vunpack.c.l.b16 %v1146
    %v1761 = vunpack.c.h.b16 %v1146
    %v1762 = vunpack.c.l.b16 %v1147
    %v1763 = vunpack.c.h.b16 %v1147
    %v1764 = vunpack.c.l.b16 %v1148
    %v1765 = vunpack.c.h.b16 %v1148
    %v1766 = vunpack.c.l.b16 %v1149
    %v1767 = vunpack.c.h.b16 %v1149
    %v1768 = vunpack.c.l.b16 %v1150
    %v1769 = vunpack.c.h.b16 %v1150
    %v1770 = vunpack.c.l.b16 %v1151
    %v1771 = vunpack.c.h.b16 %v1151
    %v1772 = vunpack.c.l.b16 %v1152
    %v1773 = vunpack.c.h.b16 %v1152
    %v1774 = vunpack.c.l.b16 %v1153
    %v1775 = vunpack.c.h.b16 %v1153
    %v1776 = vunpack.c.l.b16 %v1154
    %v1777 = vunpack.c.h.b16 %v1154
    %v1778 = vunpack.c.l.b16 %v1155
    %v1779 = vunpack.c.h.b16 %v1155
    %v1780 = vunpack.c.l.b16 %v1156
    %v1781 = vunpack.c.h.b16 %v1156
    %v1782 = vunpack.c.l.b16 %v1157
    %v1783 = vunpack.c.h.b16 %v1157
    %v1784 = vunpack.c.l.b16 %v1158
    %v1785 = vunpack.c.h.b16 %v1158
    %v1786 = vunpack.c.l.b16 %v1159
    %v1787 = vunpack.c.h.b16 %v1159
    %v1788 = vunpack.c.l.b16 %v1160
    %v1789 = vunpack.c.h.b16 %v1160
    %v1790 = vunpack.c.l.b16 %v1161
    %v1791 = vunpack.c.h.b16 %v1161
    %v1792 = vunpack.c.l.b16 %v1162
    %v1793 = vunpack.c.h.b16 %v1162
    %v1794 = vunpack.c.l.b16 %v1163
    %v1795 = vunpack.c.h.b16 %v1163
    %v1796 = vunpack.c.l.b16 %v1164
    %v1797 = vunpack.c.h.b16 %v1164
    %v1798 = vunpack.c.l.b16 %v1165
    %v1799 = vunpack.c.h.b16 %v1165
    %v1800 = vunpack.c.l.b16 %v1166
    %v1801 = vunpack.c.h.b16 %v1166
    %v1802 = vunpack.c.l.b16 %v1167
    %v1803 = vunpack.c.h.b16 %v1167
    %v1804 = vunpack.c.l.b16 %v1168
    %v1805 = vunpack.c.h.b16 %v1168
    %v1806 = vunpack.c.l.b16 %v1169
    %v1807 = vunpack.c.h.b16 %v1169
    %v1808 = vunpack.c.l.b16 %v1170
    %v1809 = vunpack.c.h.b16 %v1170
    %v1810 = vunpack.c.l.b16 %v1171
    %v1811 = vunpack.c.h.b16 %v1171
    %v1812 = vunpack.c.l.b16 %v1172
    %v1813 = vunpack.c.h.b16 %v1172
    %v1814 = vunpack.c.l.b16 %v1173
    %v1815 = vunpack.c.h.b16 %v1173
    %v1816 = vunpack.c.l.b16 %v1174
    %v1817 = vunpack.c.h.b16 %v1174
    %v1818 = vunpack.c.l.b16 %v1175
    %v1819 = vunpack.c.h.b16 %v1175
    %v1820 = vunpack.c.l.b16 %v1176
    %v1821 = vunpack.c.h.b16 %v1176
    %v1822 = vunpack.c.l.b16 %v1177
    %v1823 = vunpack.c.h.b16 %v1177
    %v1824 = vunpack.c.l.b16 %v1178
    %v1825 = vunpack.c.h.b16 %v1178
    %v1826 = vunpack.c.l.b16 %v1179
    %v1827 = vunpack.c.h.b16 %v1179
    %v1828 = vunpack.c.l.b16 %v1180
    %v1829 = vunpack.c.h.b16 %v1180
    %v1830 = vunpack.c.l.b16 %v1181
    %v1831 = vunpack.c.h.b16 %v1181
    %v1832 = vunpack.c.l.b16 %v1182
    %v1833 = vunpack.c.h.b16 %v1182
    %v1834 = vunpack.c.l.b16 %v1183
    %v1835 = vunpack.c.h.b16 %v1183
    %v1836 = vunpack.c.l.b16 %v1184
    %v1837 = vunpack.c.h.b16 %v1184
    %v1838 = vunpack.c.l.b16 %v1185
    %v1839 = vunpack.c.h.b16 %v1185
    %v1840 = vunpack.c.l.b16 %v1186
    %v1841 = vunpack.c.h.b16 %v1186
    %v1842 = vunpack.c.l.b16 %v1187
    %v1843 = vunpack.c.h.b16 %v1187
    %v1844 = vunpack.c.l.b16 %v1188
    %v1845 = vunpack.c.h.b16 %v1188
    %v1846 = vunpack.c.l.b16 %v1189
    %v1847 = vunpack.c.h.b16 %v1189
    %v1848 = vunpack.c.l.b16 %v1190
    %v1849 = vunpack.c.h.b16 %v1190
    %v1850 = vunpack.c.l.b16 %v1191
    %v1851 = vunpack.c.h.b16 %v1191
    %v1852 = vunpack.c.l.b16 %v1192
    %v1853 = vunpack.c.h.b16 %v1192
    %v1854 = vunpack.c.l.b16 %v1193
    %v1855 = vunpack.c.h.b16 %v1193
    %v1856 = vpack.c.b16 %v1732, %v1728
    %v1857 = vpack.c.b16 %v1733, %v1729
    %v1858 = vpack.c.b16 %v1734, %v1730
    %v1859 = vpack.c.b16 %v1735, %v1731
    %v1860 = vpack.c.b16 %v1740, %v1736
    %v1861 = vpack.c.b16 %v1741, %v1737
    %v1862 = vpack.c.b16 %v1742, %v1738
    %v1863 = vpack.c.b16 %v1743, %v1739
    %v1864 = vpack.c.b16 %v1748, %v1744
    %v1865 = vpack.c.b16 %v1749, %v1745
    %v1866 = vpack.c.b16 %v1750, %v1746
    %v1867 = vpack.c.b16 %v1751, %v1747
    %v1868 = vpack.c.b16 %v1756, %v1752
    %v1869 = vpack.c.b16 %v1757, %v1753
    %v1870 = vpack.c.b16 %v1758, %v1754
    %v1871 = vpack.c.b16 %v1759, %v1755
    %v1872 = vpack.c.b16 %v1764, %v1760
    %v1873 = vpack.c.b16 %v1765, %v1761
    %v1874 = vpack.c.b16 %v1766, %v1762
    %v1875 = vpack.c.b16 %v1767, %v1763
    %v1876 = vpack.c.b16 %v1772, %v1768
    %v1877 = vpack.c.b16 %v1773, %v1769
    %v1878 = vpack.c.b16 %v1774, %v1770
    %v1879 = vpack.c.b16 %v1775, %v1771
    %v1880 = vpack.c.b16 %v1780, %v1776
    %v1881 = vpack.c.b16 %v1781, %v1777
    %v1882 = vpack.c.b16 %v1782, %v1778
    %v1883 = vpack.c.b16 %v1783, %v1779
    %v1884 = vpack.c.b16 %v1788, %v1784
    %v1885 = vpack.c.b16 %v1789, %v1785
    %v1886 = vpack.c.b16 %v1790, %v1786
    %v1887 = vpack.c.b16 %v1791, %v1787
    %v1888 = vpack.c.b16 %v1796, %v1792
    %v1889 = vpack.c.b16 %v1797, %v1793
    %v1890 = vpack.c.b16 %v1798, %v1794
    %v1891 = vpack.c.b16 %v1799, %v1795
    %v1892 = vpack.c.b16 %v1804, %v1800
    %v1893 = vpack.c.b16 %v1805, %v1801
    %v1894 = vpack.c.b16 %v1806, %v1802
    %v1895 = vpack.c.b16 %v1807, %v1803
    %v1896 = vpack.c.b16 %v1812, %v1808
    %v1897 = vpack.c.b16 %v1813, %v1809
    %v1898 = vpack.c.b16 %v1814, %v1810
    %v1899 = vpack.c.b16 %v1815, %v1811
    %v1900 = vpack.c.b16 %v1820, %v1816
    %v1901 = vpack.c.b16 %v1821, %v1817
    %v1902 = vpack.c.b16 %v1822, %v1818
    %v1903 = vpack.c.b16 %v1823, %v1819
    %v1904 = vpack.c.b16 %v1828, %v1824
    %v1905 = vpack.c.b16 %v1829, %v1825
    %v1906 = vpack.c.b16 %v1830, %v1826
    %v1907 = vpack.c.b16 %v1831, %v1827
    %v1908 = vpack.c.b16 %v1836, %v1832
    %v1909 = vpack.c.b16 %v1837, %v1833
    %v1910 = vpack.c.b16 %v1838, %v1834
    %v1911 = vpack.c.b16 %v1839, %v1835
    %v1912 = vpack.c.b16 %v1844, %v1840
    %v1913 = vpack.c.b16 %v1845, %v1841
    %v1914 = vpack.c.b16 %v1846, %v1842
    %v1915 = vpack.c.b16 %v1847, %v1843
    %v1916 = vpack.c.b16 %v1852, %v1848
    %v1917 = vpack.c.b16 %v1853, %v1849
    %v1918 = vpack.c.b16 %v1854, %v1850
    %v1919 = vpack.c.b16 %v1855, %v1851
    %1984 = vmatprep.subr.bf16.mxu0 %v1857
    %1985 = vmatpush1.bf16.msra.mxu0 %v1856
    %1986 = vmatprep.subr.bf16.mxu0 %v1861
    %1987 = vmatpush1.bf16.msra.mxu0 %v1860
    %1988 = vmatprep.subr.bf16.mxu0 %v1865
    %1989 = vmatpush1.bf16.msra.mxu0 %v1864
    %1990 = vmatprep.subr.bf16.mxu0 %v1869
    %1991 = vmatpush1.bf16.msra.mxu0 %v1868
    %1992 = vmatprep.subr.bf16.mxu0 %v1873
    %1993 = vmatpush1.bf16.msra.mxu0 %v1872
    %1994 = vmatprep.subr.bf16.mxu0 %v1877
    %1995 = vmatpush1.bf16.msra.mxu0 %v1876
    %1996 = vmatprep.subr.bf16.mxu0 %v1881
    %1997 = vmatpush1.bf16.msra.mxu0 %v1880
    %1998 = vmatprep.subr.bf16.mxu0 %v1885
    %1999 = vmatpush1.bf16.msra.mxu0 %v1884
    %2000 = vmatprep.subr.bf16.mxu0 %v1889
    %2001 = vmatpush1.bf16.msra.mxu0 %v1888
    %2002 = vmatprep.subr.bf16.mxu0 %v1893
    %2003 = vmatpush1.bf16.msra.mxu0 %v1892
    %2004 = vmatprep.subr.bf16.mxu0 %v1897
    %2005 = vmatpush1.bf16.msra.mxu0 %v1896
    %2006 = vmatprep.subr.bf16.mxu0 %v1901
    %2007 = vmatpush1.bf16.msra.mxu0 %v1900
    %2008 = vmatprep.subr.bf16.mxu0 %v1905
    %2009 = vmatpush1.bf16.msra.mxu0 %v1904
    %2010 = vmatprep.subr.bf16.mxu0 %v1909
    %2011 = vmatpush1.bf16.msra.mxu0 %v1908
    %2012 = vmatprep.subr.bf16.mxu0 %v1913
    %2013 = vmatpush1.bf16.msra.mxu0 %v1912
    %2014 = vmatprep.subr.bf16.mxu0 %v1917
    %2015 = vmatpush1.bf16.msra.mxu0 %v1916
    %2016 = vmatprep.mubr.bf16.mxu0 %v1195
    %2017 = vmatmul.mubr.bf16.gmra.mrb[0].mxu0 %v1194
    %v2018 = vpop.f32.mrb[0].mxu0
    %v2019 = vadd.f32 %v1617, %v2018
    %v2020 = vpop.f32.mrb[0].mxu0
    %v2021 = vadd.f32 %v1619, %v2020
    %v2022 = vpop.f32.mrb[0].mxu0
    %v2023 = vpop.f32.mrb[0].mxu0
    %2024 = vdwg.mxu0
    %2025 = vmatprep.subr.bf16.mxu0 %v1859
    %2026 = vmatpush1.bf16.msra.mxu0 %v1858
    %2027 = vmatprep.subr.bf16.mxu0 %v1863
    %2028 = vmatpush1.bf16.msra.mxu0 %v1862
    %2029 = vmatprep.subr.bf16.mxu0 %v1867
    %2030 = vmatpush1.bf16.msra.mxu0 %v1866
    %2031 = vmatprep.subr.bf16.mxu0 %v1871
    %2032 = vmatpush1.bf16.msra.mxu0 %v1870
    %2033 = vmatprep.subr.bf16.mxu0 %v1875
    %2034 = vmatpush1.bf16.msra.mxu0 %v1874
    %2035 = vmatprep.subr.bf16.mxu0 %v1879
    %2036 = vmatpush1.bf16.msra.mxu0 %v1878
    %2037 = vmatprep.subr.bf16.mxu0 %v1883
    %2038 = vmatpush1.bf16.msra.mxu0 %v1882
    %2039 = vmatprep.subr.bf16.mxu0 %v1887
    %2040 = vmatpush1.bf16.msra.mxu0 %v1886
    %2041 = vmatprep.subr.bf16.mxu0 %v1891
    %2042 = vmatpush1.bf16.msra.mxu0 %v1890
    %2043 = vmatprep.subr.bf16.mxu0 %v1895
    %2044 = vmatpush1.bf16.msra.mxu0 %v1894
    %2045 = vmatprep.subr.bf16.mxu0 %v1899
    %2046 = vmatpush1.bf16.msra.mxu0 %v1898
    %2047 = vmatprep.subr.bf16.mxu0 %v1903
    %2048 = vmatpush1.bf16.msra.mxu0 %v1902
    %2049 = vmatprep.subr.bf16.mxu0 %v1907
    %2050 = vmatpush1.bf16.msra.mxu0 %v1906
    %2051 = vmatprep.subr.bf16.mxu0 %v1911
    %2052 = vmatpush1.bf16.msra.mxu0 %v1910
    %2053 = vmatprep.subr.bf16.mxu0 %v1915
    %2054 = vmatpush1.bf16.msra.mxu0 %v1914
    %2055 = vmatprep.subr.bf16.mxu0 %v1919
    %2056 = vmatpush1.bf16.msra.mxu0 %v1918
    %2057 = vmatprep.mubr.bf16.mxu0 %v1195
    %2058 = vmatmul.mubr.bf16.gmra.mrb[0].mxu0 %v1194
    %v2059 = vpop.f32.mrb[0].mxu0
    %v2060 = vadd.f32 %v1658, %v2059
    %v2061 = vpop.f32.mrb[0].mxu0
    %v2062 = vadd.f32 %v1660, %v2061
    %v2063 = vpop.f32.mrb[0].mxu0
    %v2064 = vpop.f32.mrb[0].mxu0
    %2065 = vdwg.mxu0
    %s2066 = scalar_lea.vmem [#allocation10], 32
    %v2067 = vld [vmem:[%s2066] ss:$8 sm:$0xf]
    %v2069 = vlaneseq
    %v2070 = vshrl.u32 %v2069, 7
    %v2071 = vsub.s32 0, %v2070
    %v2072 = vrot.slane %v2067, %v2071
    %v2073 = vlaneseq
    %v2074 = vshrl.u32 %v2073, 7
    %v2075 = vsub.s32 1, %v2074
    %v2076 = vrot.slane %v2067, %v2075
    %v2077 = vlaneseq
    %v2078 = vshrl.u32 %v2077, 7
    %v2079 = vsub.s32 2, %v2078
    %v2080 = vrot.slane %v2067, %v2079
    %v2081 = vlaneseq
    %v2082 = vshrl.u32 %v2081, 7
    %v2083 = vsub.s32 3, %v2082
    %v2084 = vrot.slane %v2067, %v2083
    %v2089 = vadd.f32 %v2019, %v2072
    %v2090 = vadd.f32 %v2021, %v2076
    %v2091 = vadd.f32 %v2060, %v2080
    %v2092 = vadd.f32 %v2062, %v2084
    %vm2093 = vcmp.gt.f32.partialorder %v2089, 0.0
    %vm2094 = vcmp.gt.f32.partialorder %v2090, 0.0
    %vm2095 = vcmp.gt.f32.partialorder %v2091, 0.0
    %vm2096 = vcmp.gt.f32.partialorder %v2092, 0.0
    %v2097 = vmul.f32 %v2089, 0.01
    %v2098 = vmul.f32 %v2090, 0.01
    %v2099 = vmul.f32 %v2091, 0.01
    %v2100 = vmul.f32 %v2092, 0.01
    %v2101 = vsel %vm2093, %v2089, %v2097
    %v2102 = vsel %vm2094, %v2090, %v2098
    %v2103 = vsel %vm2095, %v2091, %v2099
    %v2104 = vsel %vm2096, %v2092, %v2100
    %v2105 = vld [vmem:[#allocation2 + $0x600] sm:$0xff]
    %v2106 = vld [vmem:[#allocation2 + $0x608] sm:$0xff]
    %v2107 = vld [vmem:[#allocation2 + $0x610] sm:$0xff]
    %v2108 = vld [vmem:[#allocation2 + $0x618] sm:$0xff]
    %v2109 = vld [vmem:[#allocation2 + $0x620] sm:$0xff]
    %v2110 = vld [vmem:[#allocation2 + $0x628] sm:$0xff]
    %v2111 = vld [vmem:[#allocation2 + $0x630] sm:$0xff]
    %v2112 = vld [vmem:[#allocation2 + $0x638] sm:$0xff]
    %v2113 = vld [vmem:[#allocation2 + $0x640] sm:$0xff]
    %v2114 = vld [vmem:[#allocation2 + $0x648] sm:$0xff]
    %v2115 = vld [vmem:[#allocation2 + $0x650] sm:$0xff]
    %v2116 = vld [vmem:[#allocation2 + $0x658] sm:$0xff]
    %v2117 = vld [vmem:[#allocation2 + $0x660] sm:$0xff]
    %v2118 = vld [vmem:[#allocation2 + $0x668] sm:$0xff]
    %v2119 = vld [vmem:[#allocation2 + $0x670] sm:$0xff]
    %v2120 = vld [vmem:[#allocation2 + $0x678] sm:$0xff]
    %v2121 = vld [vmem:[#allocation2 + $0x680] sm:$0xff]
    %v2122 = vld [vmem:[#allocation2 + $0x688] sm:$0xff]
    %v2123 = vld [vmem:[#allocation2 + $0x690] sm:$0xff]
    %v2124 = vld [vmem:[#allocation2 + $0x698] sm:$0xff]
    %v2125 = vld [vmem:[#allocation2 + $0x6a0] sm:$0xff]
    %v2126 = vld [vmem:[#allocation2 + $0x6a8] sm:$0xff]
    %v2127 = vld [vmem:[#allocation2 + $0x6b0] sm:$0xff]
    %v2128 = vld [vmem:[#allocation2 + $0x6b8] sm:$0xff]
    %v2129 = vld [vmem:[#allocation2 + $0x6c0] sm:$0xff]
    %v2130 = vld [vmem:[#allocation2 + $0x6c8] sm:$0xff]
    %v2131 = vld [vmem:[#allocation2 + $0x6d0] sm:$0xff]
    %v2132 = vld [vmem:[#allocation2 + $0x6d8] sm:$0xff]
    %v2133 = vld [vmem:[#allocation2 + $0x6e0] sm:$0xff]
    %v2134 = vld [vmem:[#allocation2 + $0x6e8] sm:$0xff]
    %v2135 = vld [vmem:[#allocation2 + $0x6f0] sm:$0xff]
    %v2136 = vld [vmem:[#allocation2 + $0x6f8] sm:$0xff]
    %v2137 = vld [vmem:[#allocation2 + $0x700] sm:$0xff]
    %v2138 = vld [vmem:[#allocation2 + $0x708] sm:$0xff]
    %v2139 = vld [vmem:[#allocation2 + $0x710] sm:$0xff]
    %v2140 = vld [vmem:[#allocation2 + $0x718] sm:$0xff]
    %v2141 = vld [vmem:[#allocation2 + $0x720] sm:$0xff]
    %v2142 = vld [vmem:[#allocation2 + $0x728] sm:$0xff]
    %v2143 = vld [vmem:[#allocation2 + $0x730] sm:$0xff]
    %v2144 = vld [vmem:[#allocation2 + $0x738] sm:$0xff]
    %v2145 = vld [vmem:[#allocation2 + $0x740] sm:$0xff]
    %v2146 = vld [vmem:[#allocation2 + $0x748] sm:$0xff]
    %v2147 = vld [vmem:[#allocation2 + $0x750] sm:$0xff]
    %v2148 = vld [vmem:[#allocation2 + $0x758] sm:$0xff]
    %v2149 = vld [vmem:[#allocation2 + $0x760] sm:$0xff]
    %v2150 = vld [vmem:[#allocation2 + $0x768] sm:$0xff]
    %v2151 = vld [vmem:[#allocation2 + $0x770] sm:$0xff]
    %v2152 = vld [vmem:[#allocation2 + $0x778] sm:$0xff]
    %v2153 = vld [vmem:[#allocation2 + $0x780] sm:$0xff]
    %v2154 = vld [vmem:[#allocation2 + $0x788] sm:$0xff]
    %v2155 = vld [vmem:[#allocation2 + $0x790] sm:$0xff]
    %v2156 = vld [vmem:[#allocation2 + $0x798] sm:$0xff]
    %v2157 = vld [vmem:[#allocation2 + $0x7a0] sm:$0xff]
    %v2158 = vld [vmem:[#allocation2 + $0x7a8] sm:$0xff]
    %v2159 = vld [vmem:[#allocation2 + $0x7b0] sm:$0xff]
    %v2160 = vld [vmem:[#allocation2 + $0x7b8] sm:$0xff]
    %v2161 = vld [vmem:[#allocation2 + $0x7c0] sm:$0xff]
    %v2162 = vld [vmem:[#allocation2 + $0x7c8] sm:$0xff]
    %v2163 = vld [vmem:[#allocation2 + $0x7d0] sm:$0xff]
    %v2164 = vld [vmem:[#allocation2 + $0x7d8] sm:$0xff]
    %v2165 = vld [vmem:[#allocation2 + $0x7e0] sm:$0xff]
    %v2166 = vld [vmem:[#allocation2 + $0x7e8] sm:$0xff]
    %v2167 = vld [vmem:[#allocation2 + $0x7f0] sm:$0xff]
    %v2168 = vld [vmem:[#allocation2 + $0x7f8] sm:$0xff]
    %v2169 = vpack.c.bf16 %v2101, %v2101
    %v2170 = vpack.c.bf16 %v2102, %v2102
    %v2171 = vpack.c.bf16 %v2103, %v2103
    %v2172 = vpack.c.bf16 %v2104, %v2104
    %s2173 = scalar_lea.vmem [#allocation10], 33
    %v2174 = vld [vmem:[%s2173] ss:$8 sm:$0x3]
    %v2176 = vlaneseq
    %v2177 = vshrl.u32 %v2176, 7
    %v2178 = vsub.s32 0, %v2177
    %v2179 = vrot.slane %v2174, %v2178
    %v2180 = vlaneseq
    %v2181 = vshrl.u32 %v2180, 7
    %v2182 = vsub.s32 1, %v2181
    %v2183 = vrot.slane %v2174, %v2182
    %2186 = vmatprep.subr.bf16.mxu0 %v2106
    %2187 = vmatpush1.bf16.msra.mxu0 %v2105
    %2188 = vmatprep.subr.bf16.mxu0 %v2108
    %2189 = vmatpush1.bf16.msra.mxu0 %v2107
    %2190 = vmatprep.subr.bf16.mxu0 %v2110
    %2191 = vmatpush1.bf16.msra.mxu0 %v2109
    %2192 = vmatprep.subr.bf16.mxu0 %v2112
    %2193 = vmatpush1.bf16.msra.mxu0 %v2111
    %2194 = vmatprep.subr.bf16.mxu0 %v2114
    %2195 = vmatpush1.bf16.msra.mxu0 %v2113
    %2196 = vmatprep.subr.bf16.mxu0 %v2116
    %2197 = vmatpush1.bf16.msra.mxu0 %v2115
    %2198 = vmatprep.subr.bf16.mxu0 %v2118
    %2199 = vmatpush1.bf16.msra.mxu0 %v2117
    %2200 = vmatprep.subr.bf16.mxu0 %v2120
    %2201 = vmatpush1.bf16.msra.mxu0 %v2119
    %2202 = vmatprep.subr.bf16.mxu0 %v2122
    %2203 = vmatpush1.bf16.msra.mxu0 %v2121
    %2204 = vmatprep.subr.bf16.mxu0 %v2124
    %2205 = vmatpush1.bf16.msra.mxu0 %v2123
    %2206 = vmatprep.subr.bf16.mxu0 %v2126
    %2207 = vmatpush1.bf16.msra.mxu0 %v2125
    %2208 = vmatprep.subr.bf16.mxu0 %v2128
    %2209 = vmatpush1.bf16.msra.mxu0 %v2127
    %2210 = vmatprep.subr.bf16.mxu0 %v2130
    %2211 = vmatpush1.bf16.msra.mxu0 %v2129
    %2212 = vmatprep.subr.bf16.mxu0 %v2132
    %2213 = vmatpush1.bf16.msra.mxu0 %v2131
    %2214 = vmatprep.subr.bf16.mxu0 %v2134
    %2215 = vmatpush1.bf16.msra.mxu0 %v2133
    %2216 = vmatprep.subr.bf16.mxu0 %v2136
    %2217 = vmatpush1.bf16.msra.mxu0 %v2135
    %2218 = vmatprep.mubr.bf16.mxu0 %v2170
    %2219 = vmatmul.mubr.bf16.gmra.mrb[0].mxu0 %v2169
    %v2220 = vpop.f32.mrb[0].mxu0
    %v2221 = vadd.f32 %v2179, %v2220
    %v2222 = vpop.f32.mrb[0].mxu0
    %v2223 = vadd.f32 %v2183, %v2222
    %v2224 = vpop.f32.mrb[0].mxu0
    %v2225 = vpop.f32.mrb[0].mxu0
    %2226 = vdwg.mxu0
    %2227 = vmatprep.subr.bf16.mxu0 %v2138
    %2228 = vmatpush1.bf16.msra.mxu0 %v2137
    %2229 = vmatprep.subr.bf16.mxu0 %v2140
    %2230 = vmatpush1.bf16.msra.mxu0 %v2139
    %2231 = vmatprep.subr.bf16.mxu0 %v2142
    %2232 = vmatpush1.bf16.msra.mxu0 %v2141
    %2233 = vmatprep.subr.bf16.mxu0 %v2144
    %2234 = vmatpush1.bf16.msra.mxu0 %v2143
    %2235 = vmatprep.subr.bf16.mxu0 %v2146
    %2236 = vmatpush1.bf16.msra.mxu0 %v2145
    %2237 = vmatprep.subr.bf16.mxu0 %v2148
    %2238 = vmatpush1.bf16.msra.mxu0 %v2147
    %2239 = vmatprep.subr.bf16.mxu0 %v2150
    %2240 = vmatpush1.bf16.msra.mxu0 %v2149
    %2241 = vmatprep.subr.bf16.mxu0 %v2152
    %2242 = vmatpush1.bf16.msra.mxu0 %v2151
    %2243 = vmatprep.subr.bf16.mxu0 %v2154
    %2244 = vmatpush1.bf16.msra.mxu0 %v2153
    %2245 = vmatprep.subr.bf16.mxu0 %v2156
    %2246 = vmatpush1.bf16.msra.mxu0 %v2155
    %2247 = vmatprep.subr.bf16.mxu0 %v2158
    %2248 = vmatpush1.bf16.msra.mxu0 %v2157
    %2249 = vmatprep.subr.bf16.mxu0 %v2160
    %2250 = vmatpush1.bf16.msra.mxu0 %v2159
    %2251 = vmatprep.subr.bf16.mxu0 %v2162
    %2252 = vmatpush1.bf16.msra.mxu0 %v2161
    %2253 = vmatprep.subr.bf16.mxu0 %v2164
    %2254 = vmatpush1.bf16.msra.mxu0 %v2163
    %2255 = vmatprep.subr.bf16.mxu0 %v2166
    %2256 = vmatpush1.bf16.msra.mxu0 %v2165
    %2257 = vmatprep.subr.bf16.mxu0 %v2168
    %2258 = vmatpush1.bf16.msra.mxu0 %v2167
    %2259 = vmatprep.mubr.bf16.mxu0 %v2172
    %2260 = vmatmul.mubr.bf16.gmra.mrb[0].mxu0 %v2171
    %v2261 = vpop.f32.mrb[0].mxu0
    %v2262 = vadd.f32 %v2221, %v2261
    %v2263 = vpop.f32.mrb[0].mxu0
    %v2264 = vadd.f32 %v2223, %v2263
    %v2265 = vpop.f32.mrb[0].mxu0
    %v2266 = vpop.f32.mrb[0].mxu0
    %2267 = vdwg.mxu0
    %vm2268 = vcmp.gt.f32.partialorder %v2262, 0.0
    %vm2269 = vcmp.gt.f32.partialorder %v2264, 0.0
    %v2270 = vmul.f32 %v2262, 0.01
    %v2271 = vmul.f32 %v2264, 0.01
    %v2272 = vsel %vm2268, %v2262, %v2270
    %v2273 = vsel %vm2269, %v2264, %v2271
    %v2274 = vld [vmem:[#allocation2 + $0x800] sm:$0xff]
    %v2275 = vld [vmem:[#allocation2 + $0x808] sm:$0xff]
    %v2276 = vld [vmem:[#allocation2 + $0x810] sm:$0xff]
    %v2277 = vld [vmem:[#allocation2 + $0x818] sm:$0xff]
    %v2278 = vld [vmem:[#allocation2 + $0x820] sm:$0xff]
    %v2279 = vld [vmem:[#allocation2 + $0x828] sm:$0xff]
    %v2280 = vld [vmem:[#allocation2 + $0x830] sm:$0xff]
    %v2281 = vld [vmem:[#allocation2 + $0x838] sm:$0xff]
    %v2282 = vld [vmem:[#allocation2 + $0x840] sm:$0xff]
    %v2283 = vld [vmem:[#allocation2 + $0x848] sm:$0xff]
    %v2284 = vld [vmem:[#allocation2 + $0x850] sm:$0xff]
    %v2285 = vld [vmem:[#allocation2 + $0x858] sm:$0xff]
    %v2286 = vld [vmem:[#allocation2 + $0x860] sm:$0xff]
    %v2287 = vld [vmem:[#allocation2 + $0x868] sm:$0xff]
    %v2288 = vld [vmem:[#allocation2 + $0x870] sm:$0xff]
    %v2289 = vld [vmem:[#allocation2 + $0x878] sm:$0xff]
    %v2290 = vld [vmem:[#allocation2 + $0x880] sm:$0xff]
    %v2291 = vld [vmem:[#allocation2 + $0x888] sm:$0xff]
    %v2292 = vld [vmem:[#allocation2 + $0x890] sm:$0xff]
    %v2293 = vld [vmem:[#allocation2 + $0x898] sm:$0xff]
    %v2294 = vld [vmem:[#allocation2 + $0x8a0] sm:$0xff]
    %v2295 = vld [vmem:[#allocation2 + $0x8a8] sm:$0xff]
    %v2296 = vld [vmem:[#allocation2 + $0x8b0] sm:$0xff]
    %v2297 = vld [vmem:[#allocation2 + $0x8b8] sm:$0xff]
    %v2298 = vld [vmem:[#allocation2 + $0x8c0] sm:$0xff]
    %v2299 = vld [vmem:[#allocation2 + $0x8c8] sm:$0xff]
    %v2300 = vld [vmem:[#allocation2 + $0x8d0] sm:$0xff]
    %v2301 = vld [vmem:[#allocation2 + $0x8d8] sm:$0xff]
    %v2302 = vld [vmem:[#allocation2 + $0x8e0] sm:$0xff]
    %v2303 = vld [vmem:[#allocation2 + $0x8e8] sm:$0xff]
    %v2304 = vld [vmem:[#allocation2 + $0x8f0] sm:$0xff]
    %v2305 = vld [vmem:[#allocation2 + $0x8f8] sm:$0xff]
    %v2306 = vpack.c.bf16 %v2272, %v2272
    %v2307 = vpack.c.bf16 %v2273, %v2273
    %s2308 = scalar_lea.vmem [#allocation10], 34
    %v2309 = vld [vmem:[%s2308] ss:$8 sm:$0x3]
    %v2311 = vlaneseq
    %v2312 = vshrl.u32 %v2311, 7
    %v2313 = vsub.s32 0, %v2312
    %v2314 = vrot.slane %v2309, %v2313
    %v2315 = vlaneseq
    %v2316 = vshrl.u32 %v2315, 7
    %v2317 = vsub.s32 1, %v2316
    %v2318 = vrot.slane %v2309, %v2317
    %2321 = vmatprep.subr.bf16.mxu0 %v2275
    %2322 = vmatpush1.bf16.msra.mxu0 %v2274
    %2323 = vmatprep.subr.bf16.mxu0 %v2277
    %2324 = vmatpush1.bf16.msra.mxu0 %v2276
    %2325 = vmatprep.subr.bf16.mxu0 %v2279
    %2326 = vmatpush1.bf16.msra.mxu0 %v2278
    %2327 = vmatprep.subr.bf16.mxu0 %v2281
    %2328 = vmatpush1.bf16.msra.mxu0 %v2280
    %2329 = vmatprep.subr.bf16.mxu0 %v2283
    %2330 = vmatpush1.bf16.msra.mxu0 %v2282
    %2331 = vmatprep.subr.bf16.mxu0 %v2285
    %2332 = vmatpush1.bf16.msra.mxu0 %v2284
    %2333 = vmatprep.subr.bf16.mxu0 %v2287
    %2334 = vmatpush1.bf16.msra.mxu0 %v2286
    %2335 = vmatprep.subr.bf16.mxu0 %v2289
    %2336 = vmatpush1.bf16.msra.mxu0 %v2288
    %2337 = vmatprep.subr.bf16.mxu0 %v2291
    %2338 = vmatpush1.bf16.msra.mxu0 %v2290
    %2339 = vmatprep.subr.bf16.mxu0 %v2293
    %2340 = vmatpush1.bf16.msra.mxu0 %v2292
    %2341 = vmatprep.subr.bf16.mxu0 %v2295
    %2342 = vmatpush1.bf16.msra.mxu0 %v2294
    %2343 = vmatprep.subr.bf16.mxu0 %v2297
    %2344 = vmatpush1.bf16.msra.mxu0 %v2296
    %2345 = vmatprep.subr.bf16.mxu0 %v2299
    %2346 = vmatpush1.bf16.msra.mxu0 %v2298
    %2347 = vmatprep.subr.bf16.mxu0 %v2301
    %2348 = vmatpush1.bf16.msra.mxu0 %v2300
    %2349 = vmatprep.subr.bf16.mxu0 %v2303
    %2350 = vmatpush1.bf16.msra.mxu0 %v2302
    %2351 = vmatprep.subr.bf16.mxu0 %v2305
    %2352 = vmatpush1.bf16.msra.mxu0 %v2304
    %2353 = vmatprep.mubr.bf16.mxu0 %v2307
    %2354 = vmatmul.mubr.bf16.gmra.mrb[0].mxu0 %v2306
    %v2355 = vpop.f32.mrb[0].mxu0
    %v2356 = vadd.f32 %v2314, %v2355
    %v2357 = vpop.f32.mrb[0].mxu0
    %v2358 = vadd.f32 %v2318, %v2357
    %v2359 = vpop.f32.mrb[0].mxu0
    %v2360 = vpop.f32.mrb[0].mxu0
    %2361 = vdwg.mxu0
    %vm2362 = vcmp.gt.f32.partialorder %v2356, 0.0
    %vm2363 = vcmp.gt.f32.partialorder %v2358, 0.0
    %v2364 = vmul.f32 %v2356, 0.01
    %v2365 = vmul.f32 %v2358, 0.01
    %v2366 = vsel %vm2362, %v2356, %v2364
    %v2367 = vsel %vm2363, %v2358, %v2365
    %v2368 = vld [vmem:[#allocation9 + $0x28] sm:$0xf]
    %v2369 = vld [vmem:[#allocation9 + $0x2c] sm:$0xf]
    %v2370 = vld [vmem:[#allocation9 + $0x30] sm:$0xf]
    %v2371 = vld [vmem:[#allocation9 + $0x34] sm:$0xf]
    %v2372 = vld [vmem:[#allocation9 + $0x38] sm:$0xf]
    %v2373 = vld [vmem:[#allocation9 + $0x3c] sm:$0xf]
    %v2374 = vld [vmem:[#allocation9 + $0x40] sm:$0xf]
    %v2375 = vld [vmem:[#allocation9 + $0x44] sm:$0xf]
    %v2376 = vld [vmem:[#allocation9 + $0x48] sm:$0xf]
    %v2377 = vld [vmem:[#allocation9 + $0x4c] sm:$0xf]
    %v2378 = vld [vmem:[#allocation9 + $0x50] sm:$0xf]
    %v2379 = vld [vmem:[#allocation9 + $0x54] sm:$0xf]
    %v2380 = vld [vmem:[#allocation9 + $0x58] sm:$0xf]
    %v2381 = vld [vmem:[#allocation9 + $0x5c] sm:$0xf]
    %v2382 = vld [vmem:[#allocation9 + $0x60] sm:$0xf]
    %v2383 = vld [vmem:[#allocation9 + $0x64] sm:$0xf]
    %v2384 = vld [vmem:[#allocation9 + $0x68] sm:$0xf]
    %v2385 = vld [vmem:[#allocation9 + $0x6c] sm:$0xf]
    %v2386 = vld [vmem:[#allocation9 + $0x70] sm:$0xf]
    %v2387 = vld [vmem:[#allocation9 + $0x74] sm:$0xf]
    %v2388 = vld [vmem:[#allocation9 + $0x78] sm:$0xf]
    %v2389 = vld [vmem:[#allocation9 + $0x7c] sm:$0xf]
    %v2390 = vld [vmem:[#allocation9 + $0x80] sm:$0xf]
    %v2391 = vld [vmem:[#allocation9 + $0x84] sm:$0xf]
    %v2392 = vld [vmem:[#allocation9 + $0x88] sm:$0xf]
    %v2393 = vld [vmem:[#allocation9 + $0x8c] sm:$0xf]
    %v2394 = vld [vmem:[#allocation9 + $0x90] sm:$0xf]
    %v2395 = vld [vmem:[#allocation9 + $0x94] sm:$0xf]
    %v2396 = vld [vmem:[#allocation9 + $0x98] sm:$0xf]
    %v2397 = vld [vmem:[#allocation9 + $0x9c] sm:$0xf]
    %v2398 = vld [vmem:[#allocation9 + $0xa0] sm:$0xf]
    %v2399 = vld [vmem:[#allocation9 + $0xa4] sm:$0xf]
    %v2400 = vpack.c.bf16 %v2366, %v2366
    %v2401 = vpack.c.bf16 %v2367, %v2367
    %v2402 = vld [vmem:[#allocation10 + $0x23] ss:$0 sm:$0xff]
    %v2435 = vunpack.c.l.b16 %v2368
    %v2436 = vunpack.c.l.b16 %v2369
    %v2437 = vunpack.c.l.b16 %v2370
    %v2438 = vunpack.c.l.b16 %v2371
    %v2439 = vunpack.c.l.b16 %v2372
    %v2440 = vunpack.c.l.b16 %v2373
    %v2441 = vunpack.c.l.b16 %v2374
    %v2442 = vunpack.c.l.b16 %v2375
    %v2443 = vunpack.c.l.b16 %v2376
    %v2444 = vunpack.c.l.b16 %v2377
    %v2445 = vunpack.c.l.b16 %v2378
    %v2446 = vunpack.c.l.b16 %v2379
    %v2447 = vunpack.c.l.b16 %v2380
    %v2448 = vunpack.c.l.b16 %v2381
    %v2449 = vunpack.c.l.b16 %v2382
    %v2450 = vunpack.c.l.b16 %v2383
    %v2451 = vunpack.c.l.b16 %v2384
    %v2452 = vunpack.c.l.b16 %v2385
    %v2453 = vunpack.c.l.b16 %v2386
    %v2454 = vunpack.c.l.b16 %v2387
    %v2455 = vunpack.c.l.b16 %v2388
    %v2456 = vunpack.c.l.b16 %v2389
    %v2457 = vunpack.c.l.b16 %v2390
    %v2458 = vunpack.c.l.b16 %v2391
    %v2459 = vunpack.c.l.b16 %v2392
    %v2460 = vunpack.c.l.b16 %v2393
    %v2461 = vunpack.c.l.b16 %v2394
    %v2462 = vunpack.c.l.b16 %v2395
    %v2463 = vunpack.c.l.b16 %v2396
    %v2464 = vunpack.c.l.b16 %v2397
    %v2465 = vunpack.c.l.b16 %v2398
    %v2466 = vunpack.c.l.b16 %v2399
    %v2467 = vpack.c.b16 %v2436, %v2435
    %v2468 = vpack.c.b16 %v2438, %v2437
    %v2469 = vpack.c.b16 %v2440, %v2439
    %v2470 = vpack.c.b16 %v2442, %v2441
    %v2471 = vpack.c.b16 %v2444, %v2443
    %v2472 = vpack.c.b16 %v2446, %v2445
    %v2473 = vpack.c.b16 %v2448, %v2447
    %v2474 = vpack.c.b16 %v2450, %v2449
    %v2475 = vpack.c.b16 %v2452, %v2451
    %v2476 = vpack.c.b16 %v2454, %v2453
    %v2477 = vpack.c.b16 %v2456, %v2455
    %v2478 = vpack.c.b16 %v2458, %v2457
    %v2479 = vpack.c.b16 %v2460, %v2459
    %v2480 = vpack.c.b16 %v2462, %v2461
    %v2481 = vpack.c.b16 %v2464, %v2463
    %v2482 = vpack.c.b16 %v2466, %v2465
    %2499 = vmatprep.subr.bf16.mxu0 0
    %2500 = vmatpush1.bf16.msra.mxu0 %v2467
    %2501 = vmatprep.subr.bf16.mxu0 0
    %2502 = vmatpush1.bf16.msra.mxu0 %v2468
    %2503 = vmatprep.subr.bf16.mxu0 0
    %2504 = vmatpush1.bf16.msra.mxu0 %v2469
    %2505 = vmatprep.subr.bf16.mxu0 0
    %2506 = vmatpush1.bf16.msra.mxu0 %v2470
    %2507 = vmatprep.subr.bf16.mxu0 0
    %2508 = vmatpush1.bf16.msra.mxu0 %v2471
    %2509 = vmatprep.subr.bf16.mxu0 0
    %2510 = vmatpush1.bf16.msra.mxu0 %v2472
    %2511 = vmatprep.subr.bf16.mxu0 0
    %2512 = vmatpush1.bf16.msra.mxu0 %v2473
    %2513 = vmatprep.subr.bf16.mxu0 0
    %2514 = vmatpush1.bf16.msra.mxu0 %v2474
    %2515 = vmatprep.subr.bf16.mxu0 0
    %2516 = vmatpush1.bf16.msra.mxu0 %v2475
    %2517 = vmatprep.subr.bf16.mxu0 0
    %2518 = vmatpush1.bf16.msra.mxu0 %v2476
    %2519 = vmatprep.subr.bf16.mxu0 0
    %2520 = vmatpush1.bf16.msra.mxu0 %v2477
    %2521 = vmatprep.subr.bf16.mxu0 0
    %2522 = vmatpush1.bf16.msra.mxu0 %v2478
    %2523 = vmatprep.subr.bf16.mxu0 0
    %2524 = vmatpush1.bf16.msra.mxu0 %v2479
    %2525 = vmatprep.subr.bf16.mxu0 0
    %2526 = vmatpush1.bf16.msra.mxu0 %v2480
    %2527 = vmatprep.subr.bf16.mxu0 0
    %2528 = vmatpush1.bf16.msra.mxu0 %v2481
    %2529 = vmatprep.subr.bf16.mxu0 0
    %2530 = vmatpush1.bf16.msra.mxu0 %v2482
    %2531 = vmatprep.mubr.bf16.mxu0 %v2401
    %2532 = vmatmul.mubr.bf16.gmra.mrb[0].mxu0 %v2400
    %v2533 = vpop.f32.mrb[0].mxu0
    %v2534 = vadd.f32 %v2402, %v2533
    %v2535 = vpop.f32.mrb[0].mxu0
    %v2536 = vpop.f32.mrb[0].mxu0
    %v2537 = vpop.f32.mrb[0].mxu0
    %2538 = vdwg.mxu0
    %v2539 = vlaneseq
    %v2540 = vand.u32 %v2539, 127
    %vm2541 = vcmp.lt.s32.totalorder %v2540, 65
    %v2542 = vsel %vm2541, %v2534, -inf
    %2543 = vmax.xlane.f32.xlu0 %v2542
    %v2544 = vpop.xlane.xlu0 %2543
    %v2545 = vsub.f32 %v2542, %v2544
    %v2546 = vmul.f32 %v2545, 1.442695
    %v2547 = vpow.pop %v2546
    %2548 = vadd.xlane.f32.xlu0 %v2547
    %v2549 = vpop.xlane.xlu0 %2548
    %v2550 = vrcp.pop %v2549
    %v2551 = vmul.f32 %v2547, %v2550
    %2552 = vst [vmem:[#allocation12] sm:$0xff] %v2551
    // Predicated region
    $region34: #{tpu_custom_call.1} parent=1 // pred_check
      _
    $region35: #{tpu_custom_call.1} parent=1 // pred_check_branch
      %2554 = sbr.rel (0) target = $region37
    $region36: #{tpu_custom_call.1} parent=1 // pred_region
      %s2556 = ssub.s32 128, 128
      %2557 = vsyncadd [#allocation6], %s2556
      %s2559 = sshll.u32 [#allocation12], 4
      %s2560 = int_to_ptr.vmem [resolvable:$true] %s2559
      %2562 = dma.vmem_to_hbm [thread:$0]  %s2560, 128, %s5, [#allocation6]
    $region37: #{tpu_custom_call.1} parent=1 // pred_fallthru
      _
    // Predicated region
    $region38: #{tpu_custom_call.1} parent=1 // pred_check
      _
    $region39: #{tpu_custom_call.1} parent=1 // pred_check_branch
      %2564 = sbr.rel (0) target = $region41
    $region40: #{tpu_custom_call.1} parent=1 // pred_region
      %2565 = dma.done [#allocation6], 128
    $region41: #{tpu_custom_call.1} parent=1 // pred_fallthru
      _
    %2566 = vsyncpa [#allocation5], 1
    %2567 = vsyncpa [#allocation8], 1
    %2568 = vsyncpa [#allocation11], 1
    %2569 = vsyncpa [#allocation6], 1
  %2570 = vsyncmov [#allocation3]
  %s2571 = vpop.sfrf %2570
  %p2572 = scmp.eq.s32.totalorder %s2571, 0
  %p2573 = pneg %p2572
  %2575 = shalt.err (%p2573)

</llo_original>
